<compile_context>
chip_gen: v7x
topology: tpu7x:2x2x1
jax: 0.10.0
libtpu: 0.0.40
codegen_flags: <defaults>
</compile_context>

<pallas_src>
import functools

import jax
import jax.numpy as jnp
from jax import lax
from jax.experimental import pallas as pl
from jax.experimental.pallas import tpu as pltpu


def _round_up(n, m):
    return (n + m - 1) // m * m


def _ds_conv_kernel(x_ref, dw_ref, b1_ref, pw_ref, b2_ref, out_ref, *, k):
    # x_ref : (1, Hp, Wp, Cp)  padded NHWC input tile (one batch element)
    # dw_ref: (k*k, Cp)        depthwise weights with BN1 scale folded in (f32)
    # b1_ref: (1, Cp)          depthwise bias folded with BN1 shift (f32)
    # pw_ref: (Cp, Op)         pointwise weights with BN2 scale folded in (bf16)
    # b2_ref: (1, Op)          pointwise bias folded with BN2 shift (f32)
    # out_ref: (1, Ho, Wo, Op)
    Ho = out_ref.shape[1]
    Wo = out_ref.shape[2]
    Op = out_ref.shape[3]
    Cp = x_ref.shape[3]

    # Hoist the sublane-shifting W offsets: k loads straight off the ref
    # (no full-tile materialization), each (Hp, Wo, Cp).
    x_cols = [x_ref[0, :, dj:dj + Wo, :] for dj in range(k)]

    # Depthwise conv: k*k shifted-window MACs on the VPU; only the cheap
    # major-dim H offset changes inside the loop.
    acc = jnp.zeros((Ho, Wo, Cp), dtype=jnp.float32)
    for di in range(k):
        for dj in range(k):
            w = dw_ref[di * k + dj, :].reshape(1, 1, Cp)
            acc = acc + x_cols[dj][di:di + Ho] * w

    # Folded BN1 shift + ReLU.
    y1 = jnp.maximum(acc + b1_ref[0, :].reshape(1, 1, Cp), 0.0)   # (Ho, Wo, Cp)

    # Pointwise 1x1 conv: bf16 operands, f32 accumulation on the MXU.
    z = jnp.dot(y1.reshape(Ho * Wo, Cp).astype(jnp.bfloat16),
                pw_ref[...],
                preferred_element_type=jnp.float32)
    z = jnp.maximum(z + b2_ref[...], 0.0)                         # BN2 shift + ReLU

    out_ref[...] = z.reshape(1, Ho, Wo, Op).astype(out_ref.dtype)


@functools.partial(jax.jit, static_argnames=("kernel_size", "padding"))
def depth_separable_conv2d(x,
                           dw_weight, dw_bias,
                           bn1_gamma, bn1_beta, bn1_mean, bn1_var,
                           pw_weight, pw_bias,
                           bn2_gamma, bn2_beta, bn2_mean, bn2_var,
                           *, kernel_size=3, padding=1, eps=1e-5):
    """x: (B, C, H, W) f32.  Returns (B, O, Ho, Wo) f32 (stride 1)."""
    B, C, H, W = x.shape
    O = pw_weight.shape[0]
    k = kernel_size
    p = padding
    Ho = H + 2 * p - k + 1
    Wo = W + 2 * p - k + 1
    Hp, Wp = H + 2 * p, W + 2 * p

    # Lane-dense channel counts.
    Cp = _round_up(C, 128)
    Op = _round_up(O, 128)

    # ---- Fold eval-mode BatchNorm into conv weights / biases (one-time). ----
    s1 = bn1_gamma * lax.rsqrt(bn1_var + eps)                       # (C,)
    b1 = (dw_bias - bn1_mean) * s1 + bn1_beta                       # (C,)
    s2 = bn2_gamma * lax.rsqrt(bn2_var + eps)                       # (O,)
    b2 = (pw_bias - bn2_mean) * s2 + bn2_beta                       # (O,)

    # Depthwise weight (C, 1, k, k) -> (k*k, C), BN1 scale folded in.
    dw = jnp.transpose(dw_weight.reshape(C, k * k), (1, 0)) * s1[None, :]
    # Pointwise weight (O, C, 1, 1) -> (C, O), BN2 scale folded in.
    pw = jnp.transpose(pw_weight.reshape(O, C) * s2[:, None], (1, 0))

    # Zero-pad channels to lane-dense widths; padded channels stay exactly 0
    # through both ReLUs (their folded biases are 0), so the final slice is exact.
    dw = jnp.pad(dw, ((0, 0), (0, Cp - C)))
    b1 = jnp.pad(b1, (0, Cp - C)).reshape(1, Cp)
    pw = jnp.pad(pw, ((0, Cp - C), (0, Op - O))).astype(jnp.bfloat16)
    b2 = jnp.pad(b2, (0, Op - O)).reshape(1, Op)

    # NCHW -> NHWC (channels on lanes); spatial + channel padding in one pass.
    x_nhwc = jnp.transpose(x, (0, 2, 3, 1))
    x_pad = jnp.pad(x_nhwc, ((0, 0), (p, p), (p, p), (0, Cp - C)))

    # Cost / VMEM bookkeeping (all Python ints; shapes are static).
    flops = 2 * B * Ho * Wo * (Cp * k * k + Cp * Op)
    bytes_accessed = 4 * (B * Hp * Wp * Cp + B * Ho * Wo * Op
                          + k * k * Cp + Cp + Op) + 2 * Cp * Op

    in_tile = Hp * Wp * Cp * 4
    out_tile = Ho * Wo * Op * 4
    temp = (3 * Hp * Wo * Cp + 2 * Ho * Wo * Cp + 2 * Ho * Wo * Op) * 4
    wts = (k * k * Cp + Cp + Op) * 4 + Cp * Op * 2
    vmem_bytes = 2 * (in_tile + out_tile) + temp + 2 * wts + (2 << 20)
    vmem_bytes = int(min(max(vmem_bytes, 4 << 20), 64 << 20))

    out_nhwc = pl.pallas_call(
        functools.partial(_ds_conv_kernel, k=k),
        out_shape=jax.ShapeDtypeStruct((B, Ho, Wo, Op), x.dtype),
        grid_spec=pltpu.PrefetchScalarGridSpec(
            num_scalar_prefetch=0,
            grid=(B,),
            in_specs=[
                pl.BlockSpec((1, Hp, Wp, Cp), lambda b: (b, 0, 0, 0)),  # input
                pl.BlockSpec((k * k, Cp), lambda b: (0, 0)),            # dw weights
                pl.BlockSpec((1, Cp), lambda b: (0, 0)),                # bias1
                pl.BlockSpec((Cp, Op), lambda b: (0, 0)),               # pw weights
                pl.BlockSpec((1, Op), lambda b: (0, 0)),                # bias2
            ],
            out_specs=pl.BlockSpec((1, Ho, Wo, Op), lambda b: (b, 0, 0, 0)),
        ),
        compiler_params=pltpu.CompilerParams(
            dimension_semantics=("parallel",),
            vmem_limit_bytes=vmem_bytes),
        cost_estimate=pl.CostEstimate(flops=flops, transcendentals=0,
                                      bytes_accessed=bytes_accessed),
    )(x_pad, dw, b1, pw, b2)

    # Drop padded output channels and go back to NCHW.
    return jnp.transpose(out_nhwc[:, :, :, :O], (0, 3, 1, 2))


def _reference(x, dw_w, dw_b, g1, be1, m1, v1, pw_w, pw_b, g2, be2, m2, v2,
               *, k, p, eps=1e-5):
    """Pure-JAX reference mirroring the PyTorch forward (eval-mode BN)."""
    C = x.shape[1]
    y = lax.conv_general_dilated(
        x, dw_w, window_strides=(1, 1), padding=((p, p), (p, p)),
        dimension_numbers=("NCHW", "OIHW", "NCHW"),
        feature_group_count=C, precision=lax.Precision.HIGHEST)
    y = y + dw_b[None, :, None, None]
    y = (y - m1[None, :, None, None]) * (g1 * lax.rsqrt(v1 + eps))[None, :, None, None] \
        + be1[None, :, None, None]
    y = jnp.maximum(y, 0.0)

    z = lax.conv_general_dilated(
        y, pw_w, window_strides=(1, 1), padding="VALID",
        dimension_numbers=("NCHW", "OIHW", "NCHW"),
        precision=lax.Precision.HIGHEST)
    z = z + pw_b[None, :, None, None]
    z = (z - m2[None, :, None, None]) * (g2 * lax.rsqrt(v2 + eps))[None, :, None, None] \
        + be2[None, :, None, None]
    z = jnp.maximum(z, 0.0)
    return z


if __name__ == "__main__":
    batch, in_ch, out_ch, H, W, k, pad = 2, 4, 8, 16, 16, 3, 1

    key = jax.random.PRNGKey(0)
    (k_x, k_dw, k_dwb, k_g1, k_b1, k_m1, k_v1,
     k_pw, k_pwb, k_g2, k_b2, k_m2, k_v2) = jax.random.split(key, 13)

    x = jax.random.normal(k_x, (batch, in_ch, H, W), dtype=jnp.float32)

    dw_weight = jax.random.normal(k_dw, (in_ch, 1, k, k), dtype=jnp.float32) * 0.2
    dw_bias = jax.random.normal(k_dwb, (in_ch,), dtype=jnp.float32) * 0.1
    bn1_gamma = jax.random.uniform(k_g1, (in_ch,), minval=0.5, maxval=1.5)
    bn1_beta = jax.random.normal(k_b1, (in_ch,), dtype=jnp.float32) * 0.1
    bn1_mean = jax.random.normal(k_m1, (in_ch,), dtype=jnp.float32) * 0.1
    bn1_var = jax.random.uniform(k_v1, (in_ch,), minval=0.5, maxval=1.5)

    pw_weight = jax.random.normal(k_pw, (out_ch, in_ch, 1, 1), dtype=jnp.float32) * 0.2
    pw_bias = jax.random.normal(k_pwb, (out_ch,), dtype=jnp.float32) * 0.1
    bn2_gamma = jax.random.uniform(k_g2, (out_ch,), minval=0.5, maxval=1.5)
    bn2_beta = jax.random.normal(k_b2, (out_ch,), dtype=jnp.float32) * 0.1
    bn2_mean = jax.random.normal(k_m2, (out_ch,), dtype=jnp.float32) * 0.1
    bn2_var = jax.random.uniform(k_v2, (out_ch,), minval=0.5, maxval=1.5)

    out = depth_separable_conv2d(
        x, dw_weight, dw_bias, bn1_gamma, bn1_beta, bn1_mean, bn1_var,
        pw_weight, pw_bias, bn2_gamma, bn2_beta, bn2_mean, bn2_var,
        kernel_size=k, padding=pad)
    out = jax.block_until_ready(out)

    ref = _reference(x, dw_weight, dw_bias, bn1_gamma, bn1_beta, bn1_mean, bn1_var,
                     pw_weight, pw_bias, bn2_gamma, bn2_beta, bn2_mean, bn2_var,
                     k=k, p=pad)

    assert out.shape == (batch, out_ch, H, W), out.shape
    # Pointwise matmul runs in bf16 (f32 accumulate) per the perf review, so the
    # tolerance vs. the f32-HIGHEST reference is loosened accordingly.
    assert jnp.allclose(out, ref, atol=5e-2, rtol=5e-2), \
        float(jnp.max(jnp.abs(out - ref)))

    print("KERNEL_OK")
</pallas_src>

<mosaic_0001>
module attributes {stable_mosaic.version = 11 : i64} {
  func.func @_ds_conv_kernel(%arg0: i32, %arg1: memref<1x18x18x128xf32, #tpu.memory_space<vmem>>, %arg2: memref<9x128xf32, #tpu.memory_space<vmem>>, %arg3: memref<1x128xf32, #tpu.memory_space<vmem>>, %arg4: memref<128x128xbf16, #tpu.memory_space<vmem>>, %arg5: memref<1x128xf32, #tpu.memory_space<vmem>>, %arg6: memref<1x16x16x128xf32, #tpu.memory_space<vmem>>) attributes {dimension_semantics = [#tpu.dimension_semantics<parallel>], iteration_bounds = array<i64: 2>, scalar_prefetch = 0 : i64, scratch_operands = 0 : i64, tpu.core_type = #tpu.core_type<tc>, window_params = [{transform_indices = @transform_0, window_bounds = array<i64: 1, 18, 18, 128>}, {pipeline_mode = #tpu.pipeline_mode<synchronous>, transform_indices = @transform_1, window_bounds = array<i64: 9, 128>}, {pipeline_mode = #tpu.pipeline_mode<synchronous>, transform_indices = @transform_2, window_bounds = array<i64: 1, 128>}, {pipeline_mode = #tpu.pipeline_mode<synchronous>, transform_indices = @transform_3, window_bounds = array<i64: 128, 128>}, {pipeline_mode = #tpu.pipeline_mode<synchronous>, transform_indices = @transform_4, window_bounds = array<i64: 1, 128>}, {transform_indices = @transform_5, window_bounds = array<i64: 1, 16, 16, 128>}]} {
    %c0 = arith.constant 0 : index
    %c0_0 = arith.constant 0 : index
    %c0_1 = arith.constant 0 : index
    %c0_2 = arith.constant 0 : index
    %0 = vector.load %arg1[%c0, %c0_0, %c0_1, %c0_2] : memref<1x18x18x128xf32, #tpu.memory_space<vmem>>, vector<1x18x16x128xf32>
    %1 = vector.shape_cast %0 : vector<1x18x16x128xf32> to vector<18x16x128xf32>
    %c0_3 = arith.constant 0 : index
    %c0_4 = arith.constant 0 : index
    %c1 = arith.constant 1 : index
    %c0_5 = arith.constant 0 : index
    %2 = vector.load %arg1[%c0_3, %c0_4, %c1, %c0_5] : memref<1x18x18x128xf32, #tpu.memory_space<vmem>>, vector<1x18x16x128xf32>
    %3 = vector.shape_cast %2 : vector<1x18x16x128xf32> to vector<18x16x128xf32>
    %c0_6 = arith.constant 0 : index
    %c0_7 = arith.constant 0 : index
    %c2 = arith.constant 2 : index
    %c0_8 = arith.constant 0 : index
    %4 = vector.load %arg1[%c0_6, %c0_7, %c2, %c0_8] : memref<1x18x18x128xf32, #tpu.memory_space<vmem>>, vector<1x18x16x128xf32>
    %5 = vector.shape_cast %4 : vector<1x18x16x128xf32> to vector<18x16x128xf32>
    %cst = arith.constant 0.000000e+00 : f32
    %6 = vector.broadcast %cst : f32 to vector<16x16x128xf32>
    %c0_9 = arith.constant 0 : index
    %c0_10 = arith.constant 0 : index
    %7 = vector.load %arg2[%c0_9, %c0_10] : memref<9x128xf32, #tpu.memory_space<vmem>>, vector<1x128xf32>
    %8 = vector.shape_cast %7 : vector<1x128xf32> to vector<128xf32>
    %9 = vector.shape_cast %8 : vector<128xf32> to vector<1x1x128xf32>
    %10 = vector.extract_strided_slice %1 {offsets = [0, 0, 0], sizes = [16, 16, 128], strides = [1, 1, 1]} : vector<18x16x128xf32> to vector<16x16x128xf32>
    %11 = vector.broadcast %9 : vector<1x1x128xf32> to vector<16x16x128xf32>
    %12 = arith.mulf %10, %11 : vector<16x16x128xf32>
    %13 = arith.addf %6, %12 : vector<16x16x128xf32>
    %c1_11 = arith.constant 1 : index
    %c0_12 = arith.constant 0 : index
    %14 = vector.load %arg2[%c1_11, %c0_12] : memref<9x128xf32, #tpu.memory_space<vmem>>, vector<1x128xf32>
    %15 = vector.shape_cast %14 : vector<1x128xf32> to vector<128xf32>
    %16 = vector.shape_cast %15 : vector<128xf32> to vector<1x1x128xf32>
    %17 = vector.extract_strided_slice %3 {offsets = [0, 0, 0], sizes = [16, 16, 128], strides = [1, 1, 1]} : vector<18x16x128xf32> to vector<16x16x128xf32>
    %18 = vector.broadcast %16 : vector<1x1x128xf32> to vector<16x16x128xf32>
    %19 = arith.mulf %17, %18 : vector<16x16x128xf32>
    %20 = arith.addf %13, %19 : vector<16x16x128xf32>
    %c2_13 = arith.constant 2 : index
    %c0_14 = arith.constant 0 : index
    %21 = vector.load %arg2[%c2_13, %c0_14] : memref<9x128xf32, #tpu.memory_space<vmem>>, vector<1x128xf32>
    %22 = vector.shape_cast %21 : vector<1x128xf32> to vector<128xf32>
    %23 = vector.shape_cast %22 : vector<128xf32> to vector<1x1x128xf32>
    %24 = vector.extract_strided_slice %5 {offsets = [0, 0, 0], sizes = [16, 16, 128], strides = [1, 1, 1]} : vector<18x16x128xf32> to vector<16x16x128xf32>
    %25 = vector.broadcast %23 : vector<1x1x128xf32> to vector<16x16x128xf32>
    %26 = arith.mulf %24, %25 : vector<16x16x128xf32>
    %27 = arith.addf %20, %26 : vector<16x16x128xf32>
    %c3 = arith.constant 3 : index
    %c0_15 = arith.constant 0 : index
    %28 = vector.load %arg2[%c3, %c0_15] : memref<9x128xf32, #tpu.memory_space<vmem>>, vector<1x128xf32>
    %29 = vector.shape_cast %28 : vector<1x128xf32> to vector<128xf32>
    %30 = vector.shape_cast %29 : vector<128xf32> to vector<1x1x128xf32>
    %31 = vector.extract_strided_slice %1 {offsets = [1, 0, 0], sizes = [16, 16, 128], strides = [1, 1, 1]} : vector<18x16x128xf32> to vector<16x16x128xf32>
    %32 = vector.broadcast %30 : vector<1x1x128xf32> to vector<16x16x128xf32>
    %33 = arith.mulf %31, %32 : vector<16x16x128xf32>
    %34 = arith.addf %27, %33 : vector<16x16x128xf32>
    %c4 = arith.constant 4 : index
    %c0_16 = arith.constant 0 : index
    %35 = vector.load %arg2[%c4, %c0_16] : memref<9x128xf32, #tpu.memory_space<vmem>>, vector<1x128xf32>
    %36 = vector.shape_cast %35 : vector<1x128xf32> to vector<128xf32>
    %37 = vector.shape_cast %36 : vector<128xf32> to vector<1x1x128xf32>
    %38 = vector.extract_strided_slice %3 {offsets = [1, 0, 0], sizes = [16, 16, 128], strides = [1, 1, 1]} : vector<18x16x128xf32> to vector<16x16x128xf32>
    %39 = vector.broadcast %37 : vector<1x1x128xf32> to vector<16x16x128xf32>
    %40 = arith.mulf %38, %39 : vector<16x16x128xf32>
    %41 = arith.addf %34, %40 : vector<16x16x128xf32>
    %c5 = arith.constant 5 : index
    %c0_17 = arith.constant 0 : index
    %42 = vector.load %arg2[%c5, %c0_17] : memref<9x128xf32, #tpu.memory_space<vmem>>, vector<1x128xf32>
    %43 = vector.shape_cast %42 : vector<1x128xf32> to vector<128xf32>
    %44 = vector.shape_cast %43 : vector<128xf32> to vector<1x1x128xf32>
    %45 = vector.extract_strided_slice %5 {offsets = [1, 0, 0], sizes = [16, 16, 128], strides = [1, 1, 1]} : vector<18x16x128xf32> to vector<16x16x128xf32>
    %46 = vector.broadcast %44 : vector<1x1x128xf32> to vector<16x16x128xf32>
    %47 = arith.mulf %45, %46 : vector<16x16x128xf32>
    %48 = arith.addf %41, %47 : vector<16x16x128xf32>
    %c6 = arith.constant 6 : index
    %c0_18 = arith.constant 0 : index
    %49 = vector.load %arg2[%c6, %c0_18] : memref<9x128xf32, #tpu.memory_space<vmem>>, vector<1x128xf32>
    %50 = vector.shape_cast %49 : vector<1x128xf32> to vector<128xf32>
    %51 = vector.shape_cast %50 : vector<128xf32> to vector<1x1x128xf32>
    %52 = vector.extract_strided_slice %1 {offsets = [2, 0, 0], sizes = [16, 16, 128], strides = [1, 1, 1]} : vector<18x16x128xf32> to vector<16x16x128xf32>
    %53 = vector.broadcast %51 : vector<1x1x128xf32> to vector<16x16x128xf32>
    %54 = arith.mulf %52, %53 : vector<16x16x128xf32>
    %55 = arith.addf %48, %54 : vector<16x16x128xf32>
    %c7 = arith.constant 7 : index
    %c0_19 = arith.constant 0 : index
    %56 = vector.load %arg2[%c7, %c0_19] : memref<9x128xf32, #tpu.memory_space<vmem>>, vector<1x128xf32>
    %57 = vector.shape_cast %56 : vector<1x128xf32> to vector<128xf32>
    %58 = vector.shape_cast %57 : vector<128xf32> to vector<1x1x128xf32>
    %59 = vector.extract_strided_slice %3 {offsets = [2, 0, 0], sizes = [16, 16, 128], strides = [1, 1, 1]} : vector<18x16x128xf32> to vector<16x16x128xf32>
    %60 = vector.broadcast %58 : vector<1x1x128xf32> to vector<16x16x128xf32>
    %61 = arith.mulf %59, %60 : vector<16x16x128xf32>
    %62 = arith.addf %55, %61 : vector<16x16x128xf32>
    %c8 = arith.constant 8 : index
    %c0_20 = arith.constant 0 : index
    %63 = vector.load %arg2[%c8, %c0_20] : memref<9x128xf32, #tpu.memory_space<vmem>>, vector<1x128xf32>
    %64 = vector.shape_cast %63 : vector<1x128xf32> to vector<128xf32>
    %65 = vector.shape_cast %64 : vector<128xf32> to vector<1x1x128xf32>
    %66 = vector.extract_strided_slice %5 {offsets = [2, 0, 0], sizes = [16, 16, 128], strides = [1, 1, 1]} : vector<18x16x128xf32> to vector<16x16x128xf32>
    %67 = vector.broadcast %65 : vector<1x1x128xf32> to vector<16x16x128xf32>
    %68 = arith.mulf %66, %67 : vector<16x16x128xf32>
    %69 = arith.addf %62, %68 : vector<16x16x128xf32>
    %c0_21 = arith.constant 0 : index
    %c0_22 = arith.constant 0 : index
    %70 = vector.load %arg3[%c0_21, %c0_22] : memref<1x128xf32, #tpu.memory_space<vmem>>, vector<1x128xf32>
    %71 = vector.shape_cast %70 : vector<1x128xf32> to vector<128xf32>
    %72 = vector.shape_cast %71 : vector<128xf32> to vector<1x1x128xf32>
    %73 = vector.broadcast %72 : vector<1x1x128xf32> to vector<16x16x128xf32>
    %74 = arith.addf %69, %73 : vector<16x16x128xf32>
    %cst_23 = arith.constant 0.000000e+00 : f32
    %75 = vector.broadcast %cst_23 : f32 to vector<16x16x128xf32>
    %76 = arith.maximumf %74, %75 : vector<16x16x128xf32>
    %77 = vector.shape_cast %76 : vector<16x16x128xf32> to vector<256x128xf32>
    %78 = arith.truncf %77 : vector<256x128xf32> to vector<256x128xbf16>
    %c0_24 = arith.constant 0 : index
    %c0_25 = arith.constant 0 : index
    %79 = vector.load %arg4[%c0_24, %c0_25] : memref<128x128xbf16, #tpu.memory_space<vmem>>, vector<128x128xbf16>
    %cst_26 = arith.constant dense<0.000000e+00> : vector<256x128xf32>
    %80 = tpu.matmul %78, %79, %cst_26 {dimension_numbers = #tpu.dot_dimension_numbers<[1], [0], [0], [1], [0, 0, 1, 1], [], []>} : vector<256x128xbf16>, vector<128x128xbf16>, vector<256x128xf32> -> vector<256x128xf32>
    %c0_27 = arith.constant 0 : index
    %c0_28 = arith.constant 0 : index
    %81 = vector.load %arg5[%c0_27, %c0_28] : memref<1x128xf32, #tpu.memory_space<vmem>>, vector<1x128xf32>
    %82 = vector.broadcast %81 : vector<1x128xf32> to vector<256x128xf32>
    %83 = arith.addf %80, %82 : vector<256x128xf32>
    %cst_29 = arith.constant 0.000000e+00 : f32
    %84 = vector.broadcast %cst_29 : f32 to vector<256x128xf32>
    %85 = arith.maximumf %83, %84 : vector<256x128xf32>
    %86 = vector.shape_cast %85 : vector<256x128xf32> to vector<1x16x16x128xf32>
    %c0_30 = arith.constant 0 : index
    %c0_31 = arith.constant 0 : index
    %c0_32 = arith.constant 0 : index
    %c0_33 = arith.constant 0 : index
    %87 = vector.load %arg6[%c0_30, %c0_31, %c0_32, %c0_33] : memref<1x16x16x128xf32, #tpu.memory_space<vmem>>, vector<1x16x16x128xf32>
    tpu.vector_store %arg6[%c0_30, %c0_31, %c0_32, %c0_33], %86 {strides = array<i32>} : memref<1x16x16x128xf32, #tpu.memory_space<vmem>>, vector<1x16x16x128xf32>,
    return
  }
  func.func @transform_0(%arg0: i32) -> (i32, i32, i32, i32) {
    %c0_i32 = arith.constant 0 : i32
    %c0_i32_0 = arith.constant 0 : i32
    %c0_i32_1 = arith.constant 0 : i32
    %c0_i32_2 = arith.constant 0 : i32
    return %arg0, %c0_i32, %c0_i32_0, %c0_i32_1 : i32, i32, i32, i32
  }
  func.func @transform_1(%arg0: i32) -> (i32, i32) {
    %c0_i32 = arith.constant 0 : i32
    %c0_i32_0 = arith.constant 0 : i32
    %c0_i32_1 = arith.constant 0 : i32
    return %c0_i32, %c0_i32_0 : i32, i32
  }
  func.func @transform_2(%arg0: i32) -> (i32, i32) {
    %c0_i32 = arith.constant 0 : i32
    %c0_i32_0 = arith.constant 0 : i32
    %c0_i32_1 = arith.constant 0 : i32
    return %c0_i32, %c0_i32_0 : i32, i32
  }
  func.func @transform_3(%arg0: i32) -> (i32, i32) {
    %c0_i32 = arith.constant 0 : i32
    %c0_i32_0 = arith.constant 0 : i32
    %c0_i32_1 = arith.constant 0 : i32
    return %c0_i32, %c0_i32_0 : i32, i32
  }
  func.func @transform_4(%arg0: i32) -> (i32, i32) {
    %c0_i32 = arith.constant 0 : i32
    %c0_i32_0 = arith.constant 0 : i32
    %c0_i32_1 = arith.constant 0 : i32
    return %c0_i32, %c0_i32_0 : i32, i32
  }
  func.func @transform_5(%arg0: i32) -> (i32, i32, i32, i32) {
    %c0_i32 = arith.constant 0 : i32
    %c0_i32_0 = arith.constant 0 : i32
    %c0_i32_1 = arith.constant 0 : i32
    %c0_i32_2 = arith.constant 0 : i32
    return %arg0, %c0_i32, %c0_i32_0, %c0_i32_1 : i32, i32, i32, i32
  }
}

</mosaic_0001>

<llo_original>
// kernel: depth_separable_conv2d.1
$region0: #{depth_separable_conv2d.1}
  #allocation0 [shape = 'u32[]', space=smem, size = 0x4, offset = 0x4, fixed_abs, tag = 'smem constant byte address 0x4 - core index']
  #allocation1 [shape = 'u32[144,128]{1,0:T(1,128)}', space=vmem, size = 0x12000, scoped, tag = 'internal scratch']
  %s0 = inlined_call_operand.vmem [shape: f32[2,18,18,128], index: 0, kind: input, shape index: {}]
  %s1 = inlined_call_operand.vmem [shape: f32[9,128], index: 1, kind: input, shape index: {}]
  %s2 = inlined_call_operand.vmem [shape: f32[1,128], index: 2, kind: input, shape index: {}]
  %s3 = inlined_call_operand.vmem [shape: bf16[128,128], index: 3, kind: input, shape index: {}]
  %s4 = inlined_call_operand.vmem [shape: f32[1,128], index: 4, kind: input, shape index: {}]
  %s5 = inlined_call_operand.vmem [shape: f32[2,16,16,128], index: 5, kind: output, shape index: {}]
  %s6 = sld [smem:[#allocation0]]
  $region53: #{depth_separable_conv2d.1} parent=0
    _
  %s8 = ssub.s32 1, %s6
  %s9 = scalar_select 0, %s8, %s6
  loop: start=0, step=1, limit=4
  $region2: #{depth_separable_conv2d.1} parent=0 // loop_pre_header
    _
  $region3: #{depth_separable_conv2d.1} parent=0 // loop_header
    %s11 = sphi 0, %s15
    %p12 = scmp.ge.s32.totalorder %s11, 4
    %s21 = sphi 0, %s23
    %s24 = sphi 0, %s21
    %s25 = sphi 0, %s24
    %s41 = sphi 0, %s25
    %s45 = sphi 0, %s45
    %s47 = sphi 0, %s45
    %s48 = sphi 0, %s47
    %s62 = sphi 0, %s48
    %s66 = sphi 0, %s66
    %s68 = sphi 0, %s66
    %s69 = sphi 0, %s68
    %s83 = sphi 0, %s69
    %s87 = sphi 0, %s87
    %s89 = sphi 0, %s87
    %s90 = sphi 0, %s89
    %s104 = sphi 0, %s90
    %s108 = sphi 0, %s108
    %s110 = sphi 0, %s108
    %s111 = sphi 0, %s110
    %s125 = sphi 0, %s111
    %s131 = sphi 0, %s133
    %s134 = sphi 0, %s131
    %s135 = sphi 0, %s134
    %s151 = sphi 0, %s135
  $region4: #{depth_separable_conv2d.1} parent=0 // loop_header_branch
    %14 = sbr.rel (%p12) target = $region8
  $region5: #{depth_separable_conv2d.1} parent=0 // loop_body
    %s16 = ssub.s32 %s11, 1
    %s17 = ssub.s32 %s11, 2
    %s18 = sadd.s32 %s11, 1
    %s19 = ssub.s32 %s11, %s18
    %p20 = scmp.eq.s32.totalorder %s19, 0
    %s22 = sadd.s32 %s21, 1
    %s23 = scalar_select %p20, %s21, %s22
    %p26 = pneg %p20
    %p27 = scmp.eq.s32.totalorder %s11, 1
    %p28 = por %p26, %p27
    %p29 = scmp.ne.s32.totalorder %s21, %s24
    %p30 = scmp.eq.s32.totalorder %s11, 0
    %p31 = por %p29, %p30
    %p32 = scmp.ne.s32.totalorder %s21, %s24
    %p33 = scmp.eq.s32.totalorder %s16, 1
    %p34 = por %p32, %p33
    %p35 = scmp.ne.s32.totalorder %s24, %s25
    %p36 = scmp.eq.s32.totalorder %s16, 0
    %p37 = por %p35, %p36
    %p38 = scmp.ne.s32.totalorder %s24, %s25
    %p39 = scmp.eq.s32.totalorder %s17, 1
    %p40 = por %p38, %p39
    %p42 = scmp.ne.s32.totalorder %s25, %s41
    %p43 = scmp.eq.s32.totalorder %s17, 0
    %p44 = por %p42, %p43
    %s46 = sadd.s32 %s45, 1
    %p49 = scmp.eq.s32.totalorder %s11, 1
    %p50 = scmp.ne.s32.totalorder %s45, %s47
    %p51 = scmp.eq.s32.totalorder %s11, 0
    %p52 = por %p50, %p51
    %p53 = scmp.ne.s32.totalorder %s45, %s47
    %p54 = scmp.eq.s32.totalorder %s16, 1
    %p55 = por %p53, %p54
    %p56 = scmp.ne.s32.totalorder %s47, %s48
    %p57 = scmp.eq.s32.totalorder %s16, 0
    %p58 = por %p56, %p57
    %p59 = scmp.ne.s32.totalorder %s47, %s48
    %p60 = scmp.eq.s32.totalorder %s17, 1
    %p61 = por %p59, %p60
    %p63 = scmp.ne.s32.totalorder %s48, %s62
    %p64 = scmp.eq.s32.totalorder %s17, 0
    %p65 = por %p63, %p64
    %s67 = sadd.s32 %s66, 1
    %p70 = scmp.eq.s32.totalorder %s11, 1
    %p71 = scmp.ne.s32.totalorder %s66, %s68
    %p72 = scmp.eq.s32.totalorder %s11, 0
    %p73 = por %p71, %p72
    %p74 = scmp.ne.s32.totalorder %s66, %s68
    %p75 = scmp.eq.s32.totalorder %s16, 1
    %p76 = por %p74, %p75
    %p77 = scmp.ne.s32.totalorder %s68, %s69
    %p78 = scmp.eq.s32.totalorder %s16, 0
    %p79 = por %p77, %p78
    %p80 = scmp.ne.s32.totalorder %s68, %s69
    %p81 = scmp.eq.s32.totalorder %s17, 1
    %p82 = por %p80, %p81
    %p84 = scmp.ne.s32.totalorder %s69, %s83
    %p85 = scmp.eq.s32.totalorder %s17, 0
    %p86 = por %p84, %p85
    %s88 = sadd.s32 %s87, 1
    %p91 = scmp.eq.s32.totalorder %s11, 1
    %p92 = scmp.ne.s32.totalorder %s87, %s89
    %p93 = scmp.eq.s32.totalorder %s11, 0
    %p94 = por %p92, %p93
    %p95 = scmp.ne.s32.totalorder %s87, %s89
    %p96 = scmp.eq.s32.totalorder %s16, 1
    %p97 = por %p95, %p96
    %p98 = scmp.ne.s32.totalorder %s89, %s90
    %p99 = scmp.eq.s32.totalorder %s16, 0
    %p100 = por %p98, %p99
    %p101 = scmp.ne.s32.totalorder %s89, %s90
    %p102 = scmp.eq.s32.totalorder %s17, 1
    %p103 = por %p101, %p102
    %p105 = scmp.ne.s32.totalorder %s90, %s104
    %p106 = scmp.eq.s32.totalorder %s17, 0
    %p107 = por %p105, %p106
    %s109 = sadd.s32 %s108, 1
    %p112 = scmp.eq.s32.totalorder %s11, 1
    %p113 = scmp.ne.s32.totalorder %s108, %s110
    %p114 = scmp.eq.s32.totalorder %s11, 0
    %p115 = por %p113, %p114
    %p116 = scmp.ne.s32.totalorder %s108, %s110
    %p117 = scmp.eq.s32.totalorder %s16, 1
    %p118 = por %p116, %p117
    %p119 = scmp.ne.s32.totalorder %s110, %s111
    %p120 = scmp.eq.s32.totalorder %s16, 0
    %p121 = por %p119, %p120
    %p122 = scmp.ne.s32.totalorder %s110, %s111
    %p123 = scmp.eq.s32.totalorder %s17, 1
    %p124 = por %p122, %p123
    %p126 = scmp.ne.s32.totalorder %s111, %s125
    %p127 = scmp.eq.s32.totalorder %s17, 0
    %p128 = por %p126, %p127
    %s129 = ssub.s32 %s11, %s18
    %p130 = scmp.eq.s32.totalorder %s129, 0
    %s132 = sadd.s32 %s131, 1
    %s133 = scalar_select %p130, %s131, %s132
    %p136 = pneg %p130
    %p137 = scmp.eq.s32.totalorder %s11, 1
    %p138 = por %p136, %p137
    %p139 = scmp.ne.s32.totalorder %s131, %s134
    %p140 = scmp.eq.s32.totalorder %s11, 0
    %p141 = por %p139, %p140
    %p142 = scmp.ne.s32.totalorder %s131, %s134
    %p143 = scmp.eq.s32.totalorder %s16, 1
    %p144 = por %p142, %p143
    %p145 = scmp.ne.s32.totalorder %s134, %s135
    %p146 = scmp.eq.s32.totalorder %s16, 0
    %p147 = por %p145, %p146
    %p148 = scmp.ne.s32.totalorder %s134, %s135
    %p149 = scmp.eq.s32.totalorder %s17, 1
    %p150 = por %p148, %p149
    %p152 = scmp.ne.s32.totalorder %s135, %s151
    %p153 = scmp.eq.s32.totalorder %s17, 0
    %p154 = por %p152, %p153
    %p155 = scmp.le.s32.totalorder 1, %s11
    %p156 = scmp.lt.s32.totalorder %s11, 3
    %p157 = pnand %p155, %p156
    %p158 = pneg %p157
    // Predicated region
    $region9: #{depth_separable_conv2d.1} parent=5 // pred_check
      _
    $region10: #{depth_separable_conv2d.1} parent=5 // pred_check_branch
      %160 = sbr.rel (%p157) target = $region12
    $region11: #{depth_separable_conv2d.1} parent=5 // pred_region
      %s161 = ssub.s32 %s11, 1
      // Predicated region
      $region13: #{depth_separable_conv2d.1} parent=11 // pred_check
        %p162 = pneg %p58
      $region14: #{depth_separable_conv2d.1} parent=11 // pred_check_branch
        %164 = sbr.rel (%p162) target = $region16
      $region15: #{depth_separable_conv2d.1} parent=11 // pred_region
        _
      $region16: #{depth_separable_conv2d.1} parent=11 // pred_fallthru
        _
      // Predicated region
      $region17: #{depth_separable_conv2d.1} parent=11 // pred_check
        %p165 = pneg %p79
      $region18: #{depth_separable_conv2d.1} parent=11 // pred_check_branch
        %167 = sbr.rel (%p165) target = $region20
      $region19: #{depth_separable_conv2d.1} parent=11 // pred_region
        _
      $region20: #{depth_separable_conv2d.1} parent=11 // pred_fallthru
        _
      // Predicated region
      $region21: #{depth_separable_conv2d.1} parent=11 // pred_check
        %p168 = pneg %p100
      $region22: #{depth_separable_conv2d.1} parent=11 // pred_check_branch
        %170 = sbr.rel (%p168) target = $region24
      $region23: #{depth_separable_conv2d.1} parent=11 // pred_region
        _
      $region24: #{depth_separable_conv2d.1} parent=11 // pred_fallthru
        _
      // Predicated region
      $region25: #{depth_separable_conv2d.1} parent=11 // pred_check
        %p171 = pneg %p121
      $region26: #{depth_separable_conv2d.1} parent=11 // pred_check_branch
        %173 = sbr.rel (%p171) target = $region28
      $region27: #{depth_separable_conv2d.1} parent=11 // pred_region
        _
      $region28: #{depth_separable_conv2d.1} parent=11 // pred_fallthru
        _
    $region12: #{depth_separable_conv2d.1} parent=5 // pred_fallthru
      _
    %p174 = scmp.lt.s32.totalorder %s11, 2
    // Predicated region
    $region29: #{depth_separable_conv2d.1} parent=5 // pred_check
      %p175 = pneg %p174
    $region30: #{depth_separable_conv2d.1} parent=5 // pred_check_branch
      %177 = sbr.rel (%p175) target = $region32
    $region31: #{depth_separable_conv2d.1} parent=5 // pred_region
      // Predicated region
      $region33: #{depth_separable_conv2d.1} parent=31 // pred_check
        %p178 = pneg %p31
      $region34: #{depth_separable_conv2d.1} parent=31 // pred_check_branch
        %180 = sbr.rel (%p178) target = $region36
      $region35: #{depth_separable_conv2d.1} parent=31 // pred_region
        %p181 = scmp.lt.s32.totalorder %s11, 1
        %s182 = scalar_select %p181, %s11, 1
        %s183 = smul.addr %s182, 54
        %s184 = smul.addr %s183, 8
        %s185 = scalar_lea.vmem %s0, %s184
      $region36: #{depth_separable_conv2d.1} parent=31 // pred_fallthru
        _
    $region32: #{depth_separable_conv2d.1} parent=5 // pred_fallthru
      _
    %p186 = scmp.le.s32.totalorder 1, %s11
    %p187 = scmp.lt.s32.totalorder %s11, 3
    %p188 = pnand %p186, %p187
    %p189 = pneg %p188
    // Predicated region
    $region37: #{depth_separable_conv2d.1} parent=5 // pred_check
      _
    $region38: #{depth_separable_conv2d.1} parent=5 // pred_check_branch
      %191 = sbr.rel (%p188) target = $region40
    $region39: #{depth_separable_conv2d.1} parent=5 // pred_region
      %s192 = ssub.s32 %s11, 1
      %p193 = scmp.lt.s32.totalorder %s16, 1
      %s194 = scalar_select %p193, %s16, 1
      %s195 = smul.addr %s194, 54
      %s196 = smul.addr %s195, 8
      %s197 = scalar_lea.vmem %s0, %s196
      %p198 = pneg %p37
      %p199 = pneg %p34
      %p200 = pneg %p58
      %p201 = pneg %p55
      %p202 = pneg %p79
      %p203 = pneg %p76
      %p204 = pneg %p100
      %p205 = pneg %p97
      %p206 = pneg %p121
      %p207 = pneg %p118
      %p208 = pneg %p147
      %p209 = pneg %p144
      %p210 = scmp.lt.s32.totalorder %s16, 1
      %s211 = scalar_select %p210, %s16, 1
      %s212 = smul.addr %s211, 32
      %s213 = smul.addr %s212, 8
      %s214 = scalar_lea.vmem %s5, %s213
      %p215 = scmp.lt.s32.totalorder %s16, 1
      %s216 = scalar_select %p215, %s16, 1
      %s217 = smul.addr %s216, 54
      %s218 = smul.addr %s217, 8
      %s219 = scalar_lea.vmem %s0, %s218
      %p220 = scmp.lt.s32.totalorder %s16, 1
      %s221 = scalar_select %p220, %s16, 1
      %s222 = smul.addr %s221, 32
      %s223 = smul.addr %s222, 8
      %s224 = scalar_lea.vmem %s5, %s223
      %v226 = vld [vmem:[%s219] sm:$0xff]
      %v227 = vld [vmem:[%s219 + $0x8] sm:$0xff]
      %v228 = vld [vmem:[%s219 + $0x18] sm:$0xff]
      %v229 = vld [vmem:[%s219 + $0x20] sm:$0xff]
      %v230 = vld [vmem:[%s219 + $0x30] sm:$0xff]
      %v231 = vld [vmem:[%s219 + $0x38] sm:$0xff]
      %v232 = vld [vmem:[%s219 + $0x48] sm:$0xff]
      %v233 = vld [vmem:[%s219 + $0x50] sm:$0xff]
      %v234 = vld [vmem:[%s219 + $0x60] sm:$0xff]
      %v235 = vld [vmem:[%s219 + $0x68] sm:$0xff]
      %v236 = vld [vmem:[%s219 + $0x78] sm:$0xff]
      %v237 = vld [vmem:[%s219 + $0x80] sm:$0xff]
      %v238 = vld [vmem:[%s219 + $0x90] sm:$0xff]
      %v239 = vld [vmem:[%s219 + $0x98] sm:$0xff]
      %v240 = vld [vmem:[%s219 + $0xa8] sm:$0xff]
      %v241 = vld [vmem:[%s219 + $0xb0] sm:$0xff]
      %v242 = vld [vmem:[%s219 + $0xc0] sm:$0xff]
      %v243 = vld [vmem:[%s219 + $0xc8] sm:$0xff]
      %v244 = vld [vmem:[%s219 + $0xd8] sm:$0xff]
      %v245 = vld [vmem:[%s219 + $0xe0] sm:$0xff]
      %v246 = vld [vmem:[%s219 + $0xf0] sm:$0xff]
      %v247 = vld [vmem:[%s219 + $0xf8] sm:$0xff]
      %v248 = vld [vmem:[%s219 + $0x108] sm:$0xff]
      %v249 = vld [vmem:[%s219 + $0x110] sm:$0xff]
      %v250 = vld [vmem:[%s219 + $0x120] sm:$0xff]
      %v251 = vld [vmem:[%s219 + $0x128] sm:$0xff]
      %v252 = vld [vmem:[%s219 + $0x138] sm:$0xff]
      %v253 = vld [vmem:[%s219 + $0x140] sm:$0xff]
      %v254 = vld [vmem:[%s219 + $0x150] sm:$0xff]
      %v255 = vld [vmem:[%s219 + $0x158] sm:$0xff]
      %v256 = vld [vmem:[%s219 + $0x168] sm:$0xff]
      %v257 = vld [vmem:[%s219 + $0x170] sm:$0xff]
      %v258 = vld [vmem:[%s219 + $0x180] sm:$0xff]
      %v259 = vld [vmem:[%s219 + $0x188] sm:$0xff]
      %v260 = vld [vmem:[%s219 + $0x198] sm:$0xff]
      %v261 = vld [vmem:[%s219 + $0x1a0] sm:$0xff]
      %v262 = vld [vmem:[%s219 + $0x1] sm:$0xff]
      %v263 = vld [vmem:[%s219 + $0x9] sm:$0xff]
      %v264 = vld [vmem:[%s219 + $0x19] sm:$0xff]
      %v265 = vld [vmem:[%s219 + $0x21] sm:$0xff]
      %v266 = vld [vmem:[%s219 + $0x31] sm:$0xff]
      %v267 = vld [vmem:[%s219 + $0x39] sm:$0xff]
      %v268 = vld [vmem:[%s219 + $0x49] sm:$0xff]
      %v269 = vld [vmem:[%s219 + $0x51] sm:$0xff]
      %v270 = vld [vmem:[%s219 + $0x61] sm:$0xff]
      %v271 = vld [vmem:[%s219 + $0x69] sm:$0xff]
      %v272 = vld [vmem:[%s219 + $0x79] sm:$0xff]
      %v273 = vld [vmem:[%s219 + $0x81] sm:$0xff]
      %v274 = vld [vmem:[%s219 + $0x91] sm:$0xff]
      %v275 = vld [vmem:[%s219 + $0x99] sm:$0xff]
      %v276 = vld [vmem:[%s219 + $0xa9] sm:$0xff]
      %v277 = vld [vmem:[%s219 + $0xb1] sm:$0xff]
      %v278 = vld [vmem:[%s219 + $0xc1] sm:$0xff]
      %v279 = vld [vmem:[%s219 + $0xc9] sm:$0xff]
      %v280 = vld [vmem:[%s219 + $0xd9] sm:$0xff]
      %v281 = vld [vmem:[%s219 + $0xe1] sm:$0xff]
      %v282 = vld [vmem:[%s219 + $0xf1] sm:$0xff]
      %v283 = vld [vmem:[%s219 + $0xf9] sm:$0xff]
      %v284 = vld [vmem:[%s219 + $0x109] sm:$0xff]
      %v285 = vld [vmem:[%s219 + $0x111] sm:$0xff]
      %v286 = vld [vmem:[%s219 + $0x121] sm:$0xff]
      %v287 = vld [vmem:[%s219 + $0x129] sm:$0xff]
      %v288 = vld [vmem:[%s219 + $0x139] sm:$0xff]
      %v289 = vld [vmem:[%s219 + $0x141] sm:$0xff]
      %v290 = vld [vmem:[%s219 + $0x151] sm:$0xff]
      %v291 = vld [vmem:[%s219 + $0x159] sm:$0xff]
      %v292 = vld [vmem:[%s219 + $0x169] sm:$0xff]
      %v293 = vld [vmem:[%s219 + $0x171] sm:$0xff]
      %v294 = vld [vmem:[%s219 + $0x181] sm:$0xff]
      %v295 = vld [vmem:[%s219 + $0x189] sm:$0xff]
      %v296 = vld [vmem:[%s219 + $0x199] sm:$0xff]
      %v297 = vld [vmem:[%s219 + $0x1a1] sm:$0xff]
      %v298 = vld [vmem:[%s219 + $0x2] sm:$0xff]
      %v299 = vld [vmem:[%s219 + $0xa] sm:$0xff]
      %v300 = vld [vmem:[%s219 + $0x1a] sm:$0xff]
      %v301 = vld [vmem:[%s219 + $0x22] sm:$0xff]
      %v302 = vld [vmem:[%s219 + $0x32] sm:$0xff]
      %v303 = vld [vmem:[%s219 + $0x3a] sm:$0xff]
      %v304 = vld [vmem:[%s219 + $0x4a] sm:$0xff]
      %v305 = vld [vmem:[%s219 + $0x52] sm:$0xff]
      %v306 = vld [vmem:[%s219 + $0x62] sm:$0xff]
      %v307 = vld [vmem:[%s219 + $0x6a] sm:$0xff]
      %v308 = vld [vmem:[%s219 + $0x7a] sm:$0xff]
      %v309 = vld [vmem:[%s219 + $0x82] sm:$0xff]
      %v310 = vld [vmem:[%s219 + $0x92] sm:$0xff]
      %v311 = vld [vmem:[%s219 + $0x9a] sm:$0xff]
      %v312 = vld [vmem:[%s219 + $0xaa] sm:$0xff]
      %v313 = vld [vmem:[%s219 + $0xb2] sm:$0xff]
      %v314 = vld [vmem:[%s219 + $0xc2] sm:$0xff]
      %v315 = vld [vmem:[%s219 + $0xca] sm:$0xff]
      %v316 = vld [vmem:[%s219 + $0xda] sm:$0xff]
      %v317 = vld [vmem:[%s219 + $0xe2] sm:$0xff]
      %v318 = vld [vmem:[%s219 + $0xf2] sm:$0xff]
      %v319 = vld [vmem:[%s219 + $0xfa] sm:$0xff]
      %v320 = vld [vmem:[%s219 + $0x10a] sm:$0xff]
      %v321 = vld [vmem:[%s219 + $0x112] sm:$0xff]
      %v322 = vld [vmem:[%s219 + $0x122] sm:$0xff]
      %v323 = vld [vmem:[%s219 + $0x12a] sm:$0xff]
      %v324 = vld [vmem:[%s219 + $0x13a] sm:$0xff]
      %v325 = vld [vmem:[%s219 + $0x142] sm:$0xff]
      %v326 = vld [vmem:[%s219 + $0x152] sm:$0xff]
      %v327 = vld [vmem:[%s219 + $0x15a] sm:$0xff]
      %v328 = vld [vmem:[%s219 + $0x16a] sm:$0xff]
      %v329 = vld [vmem:[%s219 + $0x172] sm:$0xff]
      %v330 = vld [vmem:[%s219 + $0x182] sm:$0xff]
      %v331 = vld [vmem:[%s219 + $0x18a] sm:$0xff]
      %v332 = vld [vmem:[%s219 + $0x19a] sm:$0xff]
      %v333 = vld [vmem:[%s219 + $0x1a2] sm:$0xff]
      %v334 = vld [vmem:[%s1] sm:$0x1]
      %v335 = vlaneseq
      %v336 = vshrl.u32 %v335, 7
      %v337 = vsub.s32 0, %v336
      %v338 = vrot.slane %v334, %v337
      %v339 = vmul.f32 %v226, %v338
      %v340 = vmul.f32 %v227, %v338
      %v341 = vmul.f32 %v228, %v338
      %v342 = vmul.f32 %v229, %v338
      %v343 = vmul.f32 %v230, %v338
      %v344 = vmul.f32 %v231, %v338
      %v345 = vmul.f32 %v232, %v338
      %v346 = vmul.f32 %v233, %v338
      %v347 = vmul.f32 %v234, %v338
      %v348 = vmul.f32 %v235, %v338
      %v349 = vmul.f32 %v236, %v338
      %v350 = vmul.f32 %v237, %v338
      %v351 = vmul.f32 %v238, %v338
      %v352 = vmul.f32 %v239, %v338
      %v353 = vmul.f32 %v240, %v338
      %v354 = vmul.f32 %v241, %v338
      %v355 = vmul.f32 %v242, %v338
      %v356 = vmul.f32 %v243, %v338
      %v357 = vmul.f32 %v244, %v338
      %v358 = vmul.f32 %v245, %v338
      %v359 = vmul.f32 %v246, %v338
      %v360 = vmul.f32 %v247, %v338
      %v361 = vmul.f32 %v248, %v338
      %v362 = vmul.f32 %v249, %v338
      %v363 = vmul.f32 %v250, %v338
      %v364 = vmul.f32 %v251, %v338
      %v365 = vmul.f32 %v252, %v338
      %v366 = vmul.f32 %v253, %v338
      %v367 = vmul.f32 %v254, %v338
      %v368 = vmul.f32 %v255, %v338
      %v369 = vmul.f32 %v256, %v338
      %v370 = vmul.f32 %v257, %v338
      %v371 = vadd.f32 %v339, 0.0
      %v372 = vadd.f32 %v340, 0.0
      %v373 = vadd.f32 %v341, 0.0
      %v374 = vadd.f32 %v342, 0.0
      %v375 = vadd.f32 %v343, 0.0
      %v376 = vadd.f32 %v344, 0.0
      %v377 = vadd.f32 %v345, 0.0
      %v378 = vadd.f32 %v346, 0.0
      %v379 = vadd.f32 %v347, 0.0
      %v380 = vadd.f32 %v348, 0.0
      %v381 = vadd.f32 %v349, 0.0
      %v382 = vadd.f32 %v350, 0.0
      %v383 = vadd.f32 %v351, 0.0
      %v384 = vadd.f32 %v352, 0.0
      %v385 = vadd.f32 %v353, 0.0
      %v386 = vadd.f32 %v354, 0.0
      %v387 = vadd.f32 %v355, 0.0
      %v388 = vadd.f32 %v356, 0.0
      %v389 = vadd.f32 %v357, 0.0
      %v390 = vadd.f32 %v358, 0.0
      %v391 = vadd.f32 %v359, 0.0
      %v392 = vadd.f32 %v360, 0.0
      %v393 = vadd.f32 %v361, 0.0
      %v394 = vadd.f32 %v362, 0.0
      %v395 = vadd.f32 %v363, 0.0
      %v396 = vadd.f32 %v364, 0.0
      %v397 = vadd.f32 %v365, 0.0
      %v398 = vadd.f32 %v366, 0.0
      %v399 = vadd.f32 %v367, 0.0
      %v400 = vadd.f32 %v368, 0.0
      %v401 = vadd.f32 %v369, 0.0
      %v402 = vadd.f32 %v370, 0.0
      %v403 = vld [vmem:[%s1 + $0x1] sm:$0x1]
      %v404 = vlaneseq
      %v405 = vshrl.u32 %v404, 7
      %v406 = vsub.s32 0, %v405
      %v407 = vrot.slane %v403, %v406
      %v408 = vmul.f32 %v262, %v407
      %v409 = vmul.f32 %v263, %v407
      %v410 = vmul.f32 %v264, %v407
      %v411 = vmul.f32 %v265, %v407
      %v412 = vmul.f32 %v266, %v407
      %v413 = vmul.f32 %v267, %v407
      %v414 = vmul.f32 %v268, %v407
      %v415 = vmul.f32 %v269, %v407
      %v416 = vmul.f32 %v270, %v407
      %v417 = vmul.f32 %v271, %v407
      %v418 = vmul.f32 %v272, %v407
      %v419 = vmul.f32 %v273, %v407
      %v420 = vmul.f32 %v274, %v407
      %v421 = vmul.f32 %v275, %v407
      %v422 = vmul.f32 %v276, %v407
      %v423 = vmul.f32 %v277, %v407
      %v424 = vmul.f32 %v278, %v407
      %v425 = vmul.f32 %v279, %v407
      %v426 = vmul.f32 %v280, %v407
      %v427 = vmul.f32 %v281, %v407
      %v428 = vmul.f32 %v282, %v407
      %v429 = vmul.f32 %v283, %v407
      %v430 = vmul.f32 %v284, %v407
      %v431 = vmul.f32 %v285, %v407
      %v432 = vmul.f32 %v286, %v407
      %v433 = vmul.f32 %v287, %v407
      %v434 = vmul.f32 %v288, %v407
      %v435 = vmul.f32 %v289, %v407
      %v436 = vmul.f32 %v290, %v407
      %v437 = vmul.f32 %v291, %v407
      %v438 = vmul.f32 %v292, %v407
      %v439 = vmul.f32 %v293, %v407
      %v440 = vadd.f32 %v371, %v408
      %v441 = vadd.f32 %v372, %v409
      %v442 = vadd.f32 %v373, %v410
      %v443 = vadd.f32 %v374, %v411
      %v444 = vadd.f32 %v375, %v412
      %v445 = vadd.f32 %v376, %v413
      %v446 = vadd.f32 %v377, %v414
      %v447 = vadd.f32 %v378, %v415
      %v448 = vadd.f32 %v379, %v416
      %v449 = vadd.f32 %v380, %v417
      %v450 = vadd.f32 %v381, %v418
      %v451 = vadd.f32 %v382, %v419
      %v452 = vadd.f32 %v383, %v420
      %v453 = vadd.f32 %v384, %v421
      %v454 = vadd.f32 %v385, %v422
      %v455 = vadd.f32 %v386, %v423
      %v456 = vadd.f32 %v387, %v424
      %v457 = vadd.f32 %v388, %v425
      %v458 = vadd.f32 %v389, %v426
      %v459 = vadd.f32 %v390, %v427
      %v460 = vadd.f32 %v391, %v428
      %v461 = vadd.f32 %v392, %v429
      %v462 = vadd.f32 %v393, %v430
      %v463 = vadd.f32 %v394, %v431
      %v464 = vadd.f32 %v395, %v432
      %v465 = vadd.f32 %v396, %v433
      %v466 = vadd.f32 %v397, %v434
      %v467 = vadd.f32 %v398, %v435
      %v468 = vadd.f32 %v399, %v436
      %v469 = vadd.f32 %v400, %v437
      %v470 = vadd.f32 %v401, %v438
      %v471 = vadd.f32 %v402, %v439
      %v472 = vld [vmem:[%s1 + $0x2] sm:$0x1]
      %v473 = vlaneseq
      %v474 = vshrl.u32 %v473, 7
      %v475 = vsub.s32 0, %v474
      %v476 = vrot.slane %v472, %v475
      %v477 = vmul.f32 %v298, %v476
      %v478 = vmul.f32 %v299, %v476
      %v479 = vmul.f32 %v300, %v476
      %v480 = vmul.f32 %v301, %v476
      %v481 = vmul.f32 %v302, %v476
      %v482 = vmul.f32 %v303, %v476
      %v483 = vmul.f32 %v304, %v476
      %v484 = vmul.f32 %v305, %v476
      %v485 = vmul.f32 %v306, %v476
      %v486 = vmul.f32 %v307, %v476
      %v487 = vmul.f32 %v308, %v476
      %v488 = vmul.f32 %v309, %v476
      %v489 = vmul.f32 %v310, %v476
      %v490 = vmul.f32 %v311, %v476
      %v491 = vmul.f32 %v312, %v476
      %v492 = vmul.f32 %v313, %v476
      %v493 = vmul.f32 %v314, %v476
      %v494 = vmul.f32 %v315, %v476
      %v495 = vmul.f32 %v316, %v476
      %v496 = vmul.f32 %v317, %v476
      %v497 = vmul.f32 %v318, %v476
      %v498 = vmul.f32 %v319, %v476
      %v499 = vmul.f32 %v320, %v476
      %v500 = vmul.f32 %v321, %v476
      %v501 = vmul.f32 %v322, %v476
      %v502 = vmul.f32 %v323, %v476
      %v503 = vmul.f32 %v324, %v476
      %v504 = vmul.f32 %v325, %v476
      %v505 = vmul.f32 %v326, %v476
      %v506 = vmul.f32 %v327, %v476
      %v507 = vmul.f32 %v328, %v476
      %v508 = vmul.f32 %v329, %v476
      %v509 = vadd.f32 %v440, %v477
      %v510 = vadd.f32 %v441, %v478
      %v511 = vadd.f32 %v442, %v479
      %v512 = vadd.f32 %v443, %v480
      %v513 = vadd.f32 %v444, %v481
      %v514 = vadd.f32 %v445, %v482
      %v515 = vadd.f32 %v446, %v483
      %v516 = vadd.f32 %v447, %v484
      %v517 = vadd.f32 %v448, %v485
      %v518 = vadd.f32 %v449, %v486
      %v519 = vadd.f32 %v450, %v487
      %v520 = vadd.f32 %v451, %v488
      %v521 = vadd.f32 %v452, %v489
      %v522 = vadd.f32 %v453, %v490
      %v523 = vadd.f32 %v454, %v491
      %v524 = vadd.f32 %v455, %v492
      %v525 = vadd.f32 %v456, %v493
      %v526 = vadd.f32 %v457, %v494
      %v527 = vadd.f32 %v458, %v495
      %v528 = vadd.f32 %v459, %v496
      %v529 = vadd.f32 %v460, %v497
      %v530 = vadd.f32 %v461, %v498
      %v531 = vadd.f32 %v462, %v499
      %v532 = vadd.f32 %v463, %v500
      %v533 = vadd.f32 %v464, %v501
      %v534 = vadd.f32 %v465, %v502
      %v535 = vadd.f32 %v466, %v503
      %v536 = vadd.f32 %v467, %v504
      %v537 = vadd.f32 %v468, %v505
      %v538 = vadd.f32 %v469, %v506
      %v539 = vadd.f32 %v470, %v507
      %v540 = vadd.f32 %v471, %v508
      %v541 = vld [vmem:[%s1 + $0x3] sm:$0x1]
      %v542 = vlaneseq
      %v543 = vshrl.u32 %v542, 7
      %v544 = vsub.s32 0, %v543
      %v545 = vrot.slane %v541, %v544
      %v546 = vmul.f32 %v228, %v545
      %v547 = vmul.f32 %v229, %v545
      %v548 = vmul.f32 %v230, %v545
      %v549 = vmul.f32 %v231, %v545
      %v550 = vmul.f32 %v232, %v545
      %v551 = vmul.f32 %v233, %v545
      %v552 = vmul.f32 %v234, %v545
      %v553 = vmul.f32 %v235, %v545
      %v554 = vmul.f32 %v236, %v545
      %v555 = vmul.f32 %v237, %v545
      %v556 = vmul.f32 %v238, %v545
      %v557 = vmul.f32 %v239, %v545
      %v558 = vmul.f32 %v240, %v545
      %v559 = vmul.f32 %v241, %v545
      %v560 = vmul.f32 %v242, %v545
      %v561 = vmul.f32 %v243, %v545
      %v562 = vmul.f32 %v244, %v545
      %v563 = vmul.f32 %v245, %v545
      %v564 = vmul.f32 %v246, %v545
      %v565 = vmul.f32 %v247, %v545
      %v566 = vmul.f32 %v248, %v545
      %v567 = vmul.f32 %v249, %v545
      %v568 = vmul.f32 %v250, %v545
      %v569 = vmul.f32 %v251, %v545
      %v570 = vmul.f32 %v252, %v545
      %v571 = vmul.f32 %v253, %v545
      %v572 = vmul.f32 %v254, %v545
      %v573 = vmul.f32 %v255, %v545
      %v574 = vmul.f32 %v256, %v545
      %v575 = vmul.f32 %v257, %v545
      %v576 = vmul.f32 %v258, %v545
      %v577 = vmul.f32 %v259, %v545
      %v578 = vadd.f32 %v509, %v546
      %v579 = vadd.f32 %v510, %v547
      %v580 = vadd.f32 %v511, %v548
      %v581 = vadd.f32 %v512, %v549
      %v582 = vadd.f32 %v513, %v550
      %v583 = vadd.f32 %v514, %v551
      %v584 = vadd.f32 %v515, %v552
      %v585 = vadd.f32 %v516, %v553
      %v586 = vadd.f32 %v517, %v554
      %v587 = vadd.f32 %v518, %v555
      %v588 = vadd.f32 %v519, %v556
      %v589 = vadd.f32 %v520, %v557
      %v590 = vadd.f32 %v521, %v558
      %v591 = vadd.f32 %v522, %v559
      %v592 = vadd.f32 %v523, %v560
      %v593 = vadd.f32 %v524, %v561
      %v594 = vadd.f32 %v525, %v562
      %v595 = vadd.f32 %v526, %v563
      %v596 = vadd.f32 %v527, %v564
      %v597 = vadd.f32 %v528, %v565
      %v598 = vadd.f32 %v529, %v566
      %v599 = vadd.f32 %v530, %v567
      %v600 = vadd.f32 %v531, %v568
      %v601 = vadd.f32 %v532, %v569
      %v602 = vadd.f32 %v533, %v570
      %v603 = vadd.f32 %v534, %v571
      %v604 = vadd.f32 %v535, %v572
      %v605 = vadd.f32 %v536, %v573
      %v606 = vadd.f32 %v537, %v574
      %v607 = vadd.f32 %v538, %v575
      %v608 = vadd.f32 %v539, %v576
      %v609 = vadd.f32 %v540, %v577
      %v610 = vld [vmem:[%s1 + $0x4] sm:$0x1]
      %v611 = vlaneseq
      %v612 = vshrl.u32 %v611, 7
      %v613 = vsub.s32 0, %v612
      %v614 = vrot.slane %v610, %v613
      %v615 = vmul.f32 %v264, %v614
      %v616 = vmul.f32 %v265, %v614
      %v617 = vmul.f32 %v266, %v614
      %v618 = vmul.f32 %v267, %v614
      %v619 = vmul.f32 %v268, %v614
      %v620 = vmul.f32 %v269, %v614
      %v621 = vmul.f32 %v270, %v614
      %v622 = vmul.f32 %v271, %v614
      %v623 = vmul.f32 %v272, %v614
      %v624 = vmul.f32 %v273, %v614
      %v625 = vmul.f32 %v274, %v614
      %v626 = vmul.f32 %v275, %v614
      %v627 = vmul.f32 %v276, %v614
      %v628 = vmul.f32 %v277, %v614
      %v629 = vmul.f32 %v278, %v614
      %v630 = vmul.f32 %v279, %v614
      %v631 = vmul.f32 %v280, %v614
      %v632 = vmul.f32 %v281, %v614
      %v633 = vmul.f32 %v282, %v614
      %v634 = vmul.f32 %v283, %v614
      %v635 = vmul.f32 %v284, %v614
      %v636 = vmul.f32 %v285, %v614
      %v637 = vmul.f32 %v286, %v614
      %v638 = vmul.f32 %v287, %v614
      %v639 = vmul.f32 %v288, %v614
      %v640 = vmul.f32 %v289, %v614
      %v641 = vmul.f32 %v290, %v614
      %v642 = vmul.f32 %v291, %v614
      %v643 = vmul.f32 %v292, %v614
      %v644 = vmul.f32 %v293, %v614
      %v645 = vmul.f32 %v294, %v614
      %v646 = vmul.f32 %v295, %v614
      %v647 = vadd.f32 %v578, %v615
      %v648 = vadd.f32 %v579, %v616
      %v649 = vadd.f32 %v580, %v617
      %v650 = vadd.f32 %v581, %v618
      %v651 = vadd.f32 %v582, %v619
      %v652 = vadd.f32 %v583, %v620
      %v653 = vadd.f32 %v584, %v621
      %v654 = vadd.f32 %v585, %v622
      %v655 = vadd.f32 %v586, %v623
      %v656 = vadd.f32 %v587, %v624
      %v657 = vadd.f32 %v588, %v625
      %v658 = vadd.f32 %v589, %v626
      %v659 = vadd.f32 %v590, %v627
      %v660 = vadd.f32 %v591, %v628
      %v661 = vadd.f32 %v592, %v629
      %v662 = vadd.f32 %v593, %v630
      %v663 = vadd.f32 %v594, %v631
      %v664 = vadd.f32 %v595, %v632
      %v665 = vadd.f32 %v596, %v633
      %v666 = vadd.f32 %v597, %v634
      %v667 = vadd.f32 %v598, %v635
      %v668 = vadd.f32 %v599, %v636
      %v669 = vadd.f32 %v600, %v637
      %v670 = vadd.f32 %v601, %v638
      %v671 = vadd.f32 %v602, %v639
      %v672 = vadd.f32 %v603, %v640
      %v673 = vadd.f32 %v604, %v641
      %v674 = vadd.f32 %v605, %v642
      %v675 = vadd.f32 %v606, %v643
      %v676 = vadd.f32 %v607, %v644
      %v677 = vadd.f32 %v608, %v645
      %v678 = vadd.f32 %v609, %v646
      %v679 = vld [vmem:[%s1 + $0x5] sm:$0x1]
      %v680 = vlaneseq
      %v681 = vshrl.u32 %v680, 7
      %v682 = vsub.s32 0, %v681
      %v683 = vrot.slane %v679, %v682
      %v684 = vmul.f32 %v300, %v683
      %v685 = vmul.f32 %v301, %v683
      %v686 = vmul.f32 %v302, %v683
      %v687 = vmul.f32 %v303, %v683
      %v688 = vmul.f32 %v304, %v683
      %v689 = vmul.f32 %v305, %v683
      %v690 = vmul.f32 %v306, %v683
      %v691 = vmul.f32 %v307, %v683
      %v692 = vmul.f32 %v308, %v683
      %v693 = vmul.f32 %v309, %v683
      %v694 = vmul.f32 %v310, %v683
      %v695 = vmul.f32 %v311, %v683
      %v696 = vmul.f32 %v312, %v683
      %v697 = vmul.f32 %v313, %v683
      %v698 = vmul.f32 %v314, %v683
      %v699 = vmul.f32 %v315, %v683
      %v700 = vmul.f32 %v316, %v683
      %v701 = vmul.f32 %v317, %v683
      %v702 = vmul.f32 %v318, %v683
      %v703 = vmul.f32 %v319, %v683
      %v704 = vmul.f32 %v320, %v683
      %v705 = vmul.f32 %v321, %v683
      %v706 = vmul.f32 %v322, %v683
      %v707 = vmul.f32 %v323, %v683
      %v708 = vmul.f32 %v324, %v683
      %v709 = vmul.f32 %v325, %v683
      %v710 = vmul.f32 %v326, %v683
      %v711 = vmul.f32 %v327, %v683
      %v712 = vmul.f32 %v328, %v683
      %v713 = vmul.f32 %v329, %v683
      %v714 = vmul.f32 %v330, %v683
      %v715 = vmul.f32 %v331, %v683
      %v716 = vadd.f32 %v647, %v684
      %v717 = vadd.f32 %v648, %v685
      %v718 = vadd.f32 %v649, %v686
      %v719 = vadd.f32 %v650, %v687
      %v720 = vadd.f32 %v651, %v688
      %v721 = vadd.f32 %v652, %v689
      %v722 = vadd.f32 %v653, %v690
      %v723 = vadd.f32 %v654, %v691
      %v724 = vadd.f32 %v655, %v692
      %v725 = vadd.f32 %v656, %v693
      %v726 = vadd.f32 %v657, %v694
      %v727 = vadd.f32 %v658, %v695
      %v728 = vadd.f32 %v659, %v696
      %v729 = vadd.f32 %v660, %v697
      %v730 = vadd.f32 %v661, %v698
      %v731 = vadd.f32 %v662, %v699
      %v732 = vadd.f32 %v663, %v700
      %v733 = vadd.f32 %v664, %v701
      %v734 = vadd.f32 %v665, %v702
      %v735 = vadd.f32 %v666, %v703
      %v736 = vadd.f32 %v667, %v704
      %v737 = vadd.f32 %v668, %v705
      %v738 = vadd.f32 %v669, %v706
      %v739 = vadd.f32 %v670, %v707
      %v740 = vadd.f32 %v671, %v708
      %v741 = vadd.f32 %v672, %v709
      %v742 = vadd.f32 %v673, %v710
      %v743 = vadd.f32 %v674, %v711
      %v744 = vadd.f32 %v675, %v712
      %v745 = vadd.f32 %v676, %v713
      %v746 = vadd.f32 %v677, %v714
      %v747 = vadd.f32 %v678, %v715
      %v748 = vld [vmem:[%s1 + $0x6] sm:$0x1]
      %v749 = vlaneseq
      %v750 = vshrl.u32 %v749, 7
      %v751 = vsub.s32 0, %v750
      %v752 = vrot.slane %v748, %v751
      %v753 = vmul.f32 %v230, %v752
      %v754 = vmul.f32 %v231, %v752
      %v755 = vmul.f32 %v232, %v752
      %v756 = vmul.f32 %v233, %v752
      %v757 = vmul.f32 %v234, %v752
      %v758 = vmul.f32 %v235, %v752
      %v759 = vmul.f32 %v236, %v752
      %v760 = vmul.f32 %v237, %v752
      %v761 = vmul.f32 %v238, %v752
      %v762 = vmul.f32 %v239, %v752
      %v763 = vmul.f32 %v240, %v752
      %v764 = vmul.f32 %v241, %v752
      %v765 = vmul.f32 %v242, %v752
      %v766 = vmul.f32 %v243, %v752
      %v767 = vmul.f32 %v244, %v752
      %v768 = vmul.f32 %v245, %v752
      %v769 = vmul.f32 %v246, %v752
      %v770 = vmul.f32 %v247, %v752
      %v771 = vmul.f32 %v248, %v752
      %v772 = vmul.f32 %v249, %v752
      %v773 = vmul.f32 %v250, %v752
      %v774 = vmul.f32 %v251, %v752
      %v775 = vmul.f32 %v252, %v752
      %v776 = vmul.f32 %v253, %v752
      %v777 = vmul.f32 %v254, %v752
      %v778 = vmul.f32 %v255, %v752
      %v779 = vmul.f32 %v256, %v752
      %v780 = vmul.f32 %v257, %v752
      %v781 = vmul.f32 %v258, %v752
      %v782 = vmul.f32 %v259, %v752
      %v783 = vmul.f32 %v260, %v752
      %v784 = vmul.f32 %v261, %v752
      %v785 = vadd.f32 %v716, %v753
      %v786 = vadd.f32 %v717, %v754
      %v787 = vadd.f32 %v718, %v755
      %v788 = vadd.f32 %v719, %v756
      %v789 = vadd.f32 %v720, %v757
      %v790 = vadd.f32 %v721, %v758
      %v791 = vadd.f32 %v722, %v759
      %v792 = vadd.f32 %v723, %v760
      %v793 = vadd.f32 %v724, %v761
      %v794 = vadd.f32 %v725, %v762
      %v795 = vadd.f32 %v726, %v763
      %v796 = vadd.f32 %v727, %v764
      %v797 = vadd.f32 %v728, %v765
      %v798 = vadd.f32 %v729, %v766
      %v799 = vadd.f32 %v730, %v767
      %v800 = vadd.f32 %v731, %v768
      %v801 = vadd.f32 %v732, %v769
      %v802 = vadd.f32 %v733, %v770
      %v803 = vadd.f32 %v734, %v771
      %v804 = vadd.f32 %v735, %v772
      %v805 = vadd.f32 %v736, %v773
      %v806 = vadd.f32 %v737, %v774
      %v807 = vadd.f32 %v738, %v775
      %v808 = vadd.f32 %v739, %v776
      %v809 = vadd.f32 %v740, %v777
      %v810 = vadd.f32 %v741, %v778
      %v811 = vadd.f32 %v742, %v779
      %v812 = vadd.f32 %v743, %v780
      %v813 = vadd.f32 %v744, %v781
      %v814 = vadd.f32 %v745, %v782
      %v815 = vadd.f32 %v746, %v783
      %v816 = vadd.f32 %v747, %v784
      %v817 = vld [vmem:[%s1 + $0x7] sm:$0x1]
      %v818 = vlaneseq
      %v819 = vshrl.u32 %v818, 7
      %v820 = vsub.s32 0, %v819
      %v821 = vrot.slane %v817, %v820
      %v822 = vmul.f32 %v266, %v821
      %v823 = vmul.f32 %v267, %v821
      %v824 = vmul.f32 %v268, %v821
      %v825 = vmul.f32 %v269, %v821
      %v826 = vmul.f32 %v270, %v821
      %v827 = vmul.f32 %v271, %v821
      %v828 = vmul.f32 %v272, %v821
      %v829 = vmul.f32 %v273, %v821
      %v830 = vmul.f32 %v274, %v821
      %v831 = vmul.f32 %v275, %v821
      %v832 = vmul.f32 %v276, %v821
      %v833 = vmul.f32 %v277, %v821
      %v834 = vmul.f32 %v278, %v821
      %v835 = vmul.f32 %v279, %v821
      %v836 = vmul.f32 %v280, %v821
      %v837 = vmul.f32 %v281, %v821
      %v838 = vmul.f32 %v282, %v821
      %v839 = vmul.f32 %v283, %v821
      %v840 = vmul.f32 %v284, %v821
      %v841 = vmul.f32 %v285, %v821
      %v842 = vmul.f32 %v286, %v821
      %v843 = vmul.f32 %v287, %v821
      %v844 = vmul.f32 %v288, %v821
      %v845 = vmul.f32 %v289, %v821
      %v846 = vmul.f32 %v290, %v821
      %v847 = vmul.f32 %v291, %v821
      %v848 = vmul.f32 %v292, %v821
      %v849 = vmul.f32 %v293, %v821
      %v850 = vmul.f32 %v294, %v821
      %v851 = vmul.f32 %v295, %v821
      %v852 = vmul.f32 %v296, %v821
      %v853 = vmul.f32 %v297, %v821
      %v854 = vadd.f32 %v785, %v822
      %v855 = vadd.f32 %v786, %v823
      %v856 = vadd.f32 %v787, %v824
      %v857 = vadd.f32 %v788, %v825
      %v858 = vadd.f32 %v789, %v826
      %v859 = vadd.f32 %v790, %v827
      %v860 = vadd.f32 %v791, %v828
      %v861 = vadd.f32 %v792, %v829
      %v862 = vadd.f32 %v793, %v830
      %v863 = vadd.f32 %v794, %v831
      %v864 = vadd.f32 %v795, %v832
      %v865 = vadd.f32 %v796, %v833
      %v866 = vadd.f32 %v797, %v834
      %v867 = vadd.f32 %v798, %v835
      %v868 = vadd.f32 %v799, %v836
      %v869 = vadd.f32 %v800, %v837
      %v870 = vadd.f32 %v801, %v838
      %v871 = vadd.f32 %v802, %v839
      %v872 = vadd.f32 %v803, %v840
      %v873 = vadd.f32 %v804, %v841
      %v874 = vadd.f32 %v805, %v842
      %v875 = vadd.f32 %v806, %v843
      %v876 = vadd.f32 %v807, %v844
      %v877 = vadd.f32 %v808, %v845
      %v878 = vadd.f32 %v809, %v846
      %v879 = vadd.f32 %v810, %v847
      %v880 = vadd.f32 %v811, %v848
      %v881 = vadd.f32 %v812, %v849
      %v882 = vadd.f32 %v813, %v850
      %v883 = vadd.f32 %v814, %v851
      %v884 = vadd.f32 %v815, %v852
      %v885 = vadd.f32 %v816, %v853
      %v886 = vld [vmem:[%s1 + $0x8] sm:$0x1]
      %v887 = vlaneseq
      %v888 = vshrl.u32 %v887, 7
      %v889 = vsub.s32 0, %v888
      %v890 = vrot.slane %v886, %v889
      %v891 = vmul.f32 %v302, %v890
      %v892 = vmul.f32 %v303, %v890
      %v893 = vmul.f32 %v304, %v890
      %v894 = vmul.f32 %v305, %v890
      %v895 = vmul.f32 %v306, %v890
      %v896 = vmul.f32 %v307, %v890
      %v897 = vmul.f32 %v308, %v890
      %v898 = vmul.f32 %v309, %v890
      %v899 = vmul.f32 %v310, %v890
      %v900 = vmul.f32 %v311, %v890
      %v901 = vmul.f32 %v312, %v890
      %v902 = vmul.f32 %v313, %v890
      %v903 = vmul.f32 %v314, %v890
      %v904 = vmul.f32 %v315, %v890
      %v905 = vmul.f32 %v316, %v890
      %v906 = vmul.f32 %v317, %v890
      %v907 = vmul.f32 %v318, %v890
      %v908 = vmul.f32 %v319, %v890
      %v909 = vmul.f32 %v320, %v890
      %v910 = vmul.f32 %v321, %v890
      %v911 = vmul.f32 %v322, %v890
      %v912 = vmul.f32 %v323, %v890
      %v913 = vmul.f32 %v324, %v890
      %v914 = vmul.f32 %v325, %v890
      %v915 = vmul.f32 %v326, %v890
      %v916 = vmul.f32 %v327, %v890
      %v917 = vmul.f32 %v328, %v890
      %v918 = vmul.f32 %v329, %v890
      %v919 = vmul.f32 %v330, %v890
      %v920 = vmul.f32 %v331, %v890
      %v921 = vmul.f32 %v332, %v890
      %v922 = vmul.f32 %v333, %v890
      %v923 = vadd.f32 %v854, %v891
      %v924 = vadd.f32 %v855, %v892
      %v925 = vadd.f32 %v856, %v893
      %v926 = vadd.f32 %v857, %v894
      %v927 = vadd.f32 %v858, %v895
      %v928 = vadd.f32 %v859, %v896
      %v929 = vadd.f32 %v860, %v897
      %v930 = vadd.f32 %v861, %v898
      %v931 = vadd.f32 %v862, %v899
      %v932 = vadd.f32 %v863, %v900
      %v933 = vadd.f32 %v864, %v901
      %v934 = vadd.f32 %v865, %v902
      %v935 = vadd.f32 %v866, %v903
      %v936 = vadd.f32 %v867, %v904
      %v937 = vadd.f32 %v868, %v905
      %v938 = vadd.f32 %v869, %v906
      %v939 = vadd.f32 %v870, %v907
      %v940 = vadd.f32 %v871, %v908
      %v941 = vadd.f32 %v872, %v909
      %v942 = vadd.f32 %v873, %v910
      %v943 = vadd.f32 %v874, %v911
      %v944 = vadd.f32 %v875, %v912
      %v945 = vadd.f32 %v876, %v913
      %v946 = vadd.f32 %v877, %v914
      %v947 = vadd.f32 %v878, %v915
      %v948 = vadd.f32 %v879, %v916
      %v949 = vadd.f32 %v880, %v917
      %v950 = vadd.f32 %v881, %v918
      %v951 = vadd.f32 %v882, %v919
      %v952 = vadd.f32 %v883, %v920
      %v953 = vadd.f32 %v884, %v921
      %v954 = vadd.f32 %v885, %v922
      %v955 = vld [vmem:[%s2] sm:$0x1]
      %v957 = vlaneseq
      %v958 = vshrl.u32 %v957, 7
      %v959 = vsub.s32 0, %v958
      %v960 = vrot.slane %v955, %v959
      %v962 = vadd.f32 %v923, %v960
      %v963 = vadd.f32 %v924, %v960
      %v964 = vadd.f32 %v925, %v960
      %v965 = vadd.f32 %v926, %v960
      %v966 = vadd.f32 %v927, %v960
      %v967 = vadd.f32 %v928, %v960
      %v968 = vadd.f32 %v929, %v960
      %v969 = vadd.f32 %v930, %v960
      %v970 = vadd.f32 %v931, %v960
      %v971 = vadd.f32 %v932, %v960
      %v972 = vadd.f32 %v933, %v960
      %v973 = vadd.f32 %v934, %v960
      %v974 = vadd.f32 %v935, %v960
      %v975 = vadd.f32 %v936, %v960
      %v976 = vadd.f32 %v937, %v960
      %v977 = vadd.f32 %v938, %v960
      %v978 = vadd.f32 %v939, %v960
      %v979 = vadd.f32 %v940, %v960
      %v980 = vadd.f32 %v941, %v960
      %v981 = vadd.f32 %v942, %v960
      %v982 = vadd.f32 %v943, %v960
      %v983 = vadd.f32 %v944, %v960
      %v984 = vadd.f32 %v945, %v960
      %v985 = vadd.f32 %v946, %v960
      %v986 = vadd.f32 %v947, %v960
      %v987 = vadd.f32 %v948, %v960
      %v988 = vadd.f32 %v949, %v960
      %v989 = vadd.f32 %v950, %v960
      %v990 = vadd.f32 %v951, %v960
      %v991 = vadd.f32 %v952, %v960
      %v992 = vadd.f32 %v953, %v960
      %v993 = vadd.f32 %v954, %v960
      %v994 = vmax.f32 %v962, 0.0
      %v995 = vmax.f32 %v963, 0.0
      %v996 = vmax.f32 %v964, 0.0
      %v997 = vmax.f32 %v965, 0.0
      %v998 = vmax.f32 %v966, 0.0
      %v999 = vmax.f32 %v967, 0.0
      %v1000 = vmax.f32 %v968, 0.0
      %v1001 = vmax.f32 %v969, 0.0
      %v1002 = vmax.f32 %v970, 0.0
      %v1003 = vmax.f32 %v971, 0.0
      %v1004 = vmax.f32 %v972, 0.0
      %v1005 = vmax.f32 %v973, 0.0
      %v1006 = vmax.f32 %v974, 0.0
      %v1007 = vmax.f32 %v975, 0.0
      %v1008 = vmax.f32 %v976, 0.0
      %v1009 = vmax.f32 %v977, 0.0
      %v1010 = vmax.f32 %v978, 0.0
      %v1011 = vmax.f32 %v979, 0.0
      %v1012 = vmax.f32 %v980, 0.0
      %v1013 = vmax.f32 %v981, 0.0
      %v1014 = vmax.f32 %v982, 0.0
      %v1015 = vmax.f32 %v983, 0.0
      %v1016 = vmax.f32 %v984, 0.0
      %v1017 = vmax.f32 %v985, 0.0
      %v1018 = vmax.f32 %v986, 0.0
      %v1019 = vmax.f32 %v987, 0.0
      %v1020 = vmax.f32 %v988, 0.0
      %v1021 = vmax.f32 %v989, 0.0
      %v1022 = vmax.f32 %v990, 0.0
      %v1023 = vmax.f32 %v991, 0.0
      %v1024 = vmax.f32 %v992, 0.0
      %v1025 = vmax.f32 %v993, 0.0
      %v1026 = vpack.c.bf16 %v995, %v994
      %v1027 = vpack.c.bf16 %v997, %v996
      %v1028 = vpack.c.bf16 %v999, %v998
      %v1029 = vpack.c.bf16 %v1001, %v1000
      %v1030 = vpack.c.bf16 %v1003, %v1002
      %v1031 = vpack.c.bf16 %v1005, %v1004
      %v1032 = vpack.c.bf16 %v1007, %v1006
      %v1033 = vpack.c.bf16 %v1009, %v1008
      %v1034 = vpack.c.bf16 %v1011, %v1010
      %v1035 = vpack.c.bf16 %v1013, %v1012
      %v1036 = vpack.c.bf16 %v1015, %v1014
      %v1037 = vpack.c.bf16 %v1017, %v1016
      %v1038 = vpack.c.bf16 %v1019, %v1018
      %v1039 = vpack.c.bf16 %v1021, %v1020
      %v1040 = vpack.c.bf16 %v1023, %v1022
      %v1041 = vpack.c.bf16 %v1025, %v1024
      %v1042 = vld [vmem:[%s3] sm:$0xf]
      %v1043 = vld [vmem:[%s3 + $0x4] sm:$0xf]
      %v1044 = vld [vmem:[%s3 + $0x8] sm:$0xf]
      %v1045 = vld [vmem:[%s3 + $0xc] sm:$0xf]
      %v1046 = vld [vmem:[%s3 + $0x10] sm:$0xf]
      %v1047 = vld [vmem:[%s3 + $0x14] sm:$0xf]
      %v1048 = vld [vmem:[%s3 + $0x18] sm:$0xf]
      %v1049 = vld [vmem:[%s3 + $0x1c] sm:$0xf]
      %v1050 = vld [vmem:[%s3 + $0x20] sm:$0xf]
      %v1051 = vld [vmem:[%s3 + $0x24] sm:$0xf]
      %v1052 = vld [vmem:[%s3 + $0x28] sm:$0xf]
      %v1053 = vld [vmem:[%s3 + $0x2c] sm:$0xf]
      %v1054 = vld [vmem:[%s3 + $0x30] sm:$0xf]
      %v1055 = vld [vmem:[%s3 + $0x34] sm:$0xf]
      %v1056 = vld [vmem:[%s3 + $0x38] sm:$0xf]
      %v1057 = vld [vmem:[%s3 + $0x3c] sm:$0xf]
      %v1058 = vld [vmem:[%s4] sm:$0x1]
      %v1060 = vlaneseq
      %v1061 = vshrl.u32 %v1060, 7
      %v1062 = vsub.s32 0, %v1061
      %v1063 = vrot.slane %v1058, %v1062
      %v1081 = vunpack.c.l.b16 %v1042
      %v1082 = vunpack.c.l.b16 %v1043
      %v1083 = vunpack.c.l.b16 %v1044
      %v1084 = vunpack.c.l.b16 %v1045
      %v1085 = vunpack.c.l.b16 %v1046
      %v1086 = vunpack.c.l.b16 %v1047
      %v1087 = vunpack.c.l.b16 %v1048
      %v1088 = vunpack.c.l.b16 %v1049
      %v1089 = vunpack.c.l.b16 %v1050
      %v1090 = vunpack.c.l.b16 %v1051
      %v1091 = vunpack.c.l.b16 %v1052
      %v1092 = vunpack.c.l.b16 %v1053
      %v1093 = vunpack.c.l.b16 %v1054
      %v1094 = vunpack.c.l.b16 %v1055
      %v1095 = vunpack.c.l.b16 %v1056
      %v1096 = vunpack.c.l.b16 %v1057
      %v1097 = vpack.c.b16 %v1082, %v1081
      %v1098 = vpack.c.b16 %v1084, %v1083
      %v1099 = vpack.c.b16 %v1086, %v1085
      %v1100 = vpack.c.b16 %v1088, %v1087
      %v1101 = vpack.c.b16 %v1090, %v1089
      %v1102 = vpack.c.b16 %v1092, %v1091
      %v1103 = vpack.c.b16 %v1094, %v1093
      %v1104 = vpack.c.b16 %v1096, %v1095
      %1113 = vmatprep.subr.bf16.mxu0 0
      %1114 = vmatpush1.bf16.msra.mxu0 %v1097
      %1115 = vmatprep.subr.bf16.mxu0 0
      %1116 = vmatpush1.bf16.msra.mxu0 %v1098
      %1117 = vmatprep.subr.bf16.mxu0 0
      %1118 = vmatpush1.bf16.msra.mxu0 %v1099
      %1119 = vmatprep.subr.bf16.mxu0 0
      %1120 = vmatpush1.bf16.msra.mxu0 %v1100
      %1121 = vmatprep.subr.bf16.mxu0 0
      %1122 = vmatpush1.bf16.msra.mxu0 %v1101
      %1123 = vmatprep.subr.bf16.mxu0 0
      %1124 = vmatpush1.bf16.msra.mxu0 %v1102
      %1125 = vmatprep.subr.bf16.mxu0 0
      %1126 = vmatpush1.bf16.msra.mxu0 %v1103
      %1127 = vmatprep.subr.bf16.mxu0 0
      %1128 = vmatpush1.bf16.msra.mxu0 %v1104
      %1129 = vmatprep.subr.bf16.mxu0 0
      %1130 = vmatpush1.bf16.msra.mxu0 0
      %1131 = vmatprep.subr.bf16.mxu0 0
      %1132 = vmatpush1.bf16.msra.mxu0 0
      %1133 = vmatprep.subr.bf16.mxu0 0
      %1134 = vmatpush1.bf16.msra.mxu0 0
      %1135 = vmatprep.subr.bf16.mxu0 0
      %1136 = vmatpush1.bf16.msra.mxu0 0
      %1137 = vmatprep.subr.bf16.mxu0 0
      %1138 = vmatpush1.bf16.msra.mxu0 0
      %1139 = vmatprep.subr.bf16.mxu0 0
      %1140 = vmatpush1.bf16.msra.mxu0 0
      %1141 = vmatprep.subr.bf16.mxu0 0
      %1142 = vmatpush1.bf16.msra.mxu0 0
      %1143 = vmatprep.subr.bf16.mxu0 0
      %1144 = vmatpush1.bf16.msra.mxu0 0
      %1145 = vmatprep.mubr.bf16.mxu0 0
      %1146 = vmatmul.mubr.bf16.gmra.mrb[0].mxu0 %v1026
      %v1147 = vpop.f32.mrb[0].mxu0
      %v1148 = vadd.f32 %v1063, %v1147
      %v1149 = vpop.f32.mrb[0].mxu0
      %v1150 = vpop.f32.mrb[0].mxu0
      %v1151 = vadd.f32 %v1063, %v1150
      %v1152 = vpop.f32.mrb[0].mxu0
      %1153 = vmatprep.mubr.bf16.mxu0 0
      %1154 = vmatmul.mubr.bf16.gmra.mrb[0].mxu0 %v1027
      %v1155 = vpop.f32.mrb[0].mxu0
      %v1156 = vadd.f32 %v1063, %v1155
      %v1157 = vpop.f32.mrb[0].mxu0
      %v1158 = vpop.f32.mrb[0].mxu0
      %v1159 = vadd.f32 %v1063, %v1158
      %v1160 = vpop.f32.mrb[0].mxu0
      %1161 = vmatprep.mubr.bf16.mxu0 0
      %1162 = vmatmul.mubr.bf16.gmra.mrb[0].mxu0 %v1028
      %v1163 = vpop.f32.mrb[0].mxu0
      %v1164 = vadd.f32 %v1063, %v1163
      %v1165 = vpop.f32.mrb[0].mxu0
      %v1166 = vpop.f32.mrb[0].mxu0
      %v1167 = vadd.f32 %v1063, %v1166
      %v1168 = vpop.f32.mrb[0].mxu0
      %1169 = vmatprep.mubr.bf16.mxu0 0
      %1170 = vmatmul.mubr.bf16.gmra.mrb[0].mxu0 %v1029
      %v1171 = vpop.f32.mrb[0].mxu0
      %v1172 = vadd.f32 %v1063, %v1171
      %v1173 = vpop.f32.mrb[0].mxu0
      %v1174 = vpop.f32.mrb[0].mxu0
      %v1175 = vadd.f32 %v1063, %v1174
      %v1176 = vpop.f32.mrb[0].mxu0
      %1177 = vmatprep.mubr.bf16.mxu0 0
      %1178 = vmatmul.mubr.bf16.gmra.mrb[0].mxu0 %v1030
      %v1179 = vpop.f32.mrb[0].mxu0
      %v1180 = vadd.f32 %v1063, %v1179
      %v1181 = vpop.f32.mrb[0].mxu0
      %v1182 = vpop.f32.mrb[0].mxu0
      %v1183 = vadd.f32 %v1063, %v1182
      %v1184 = vpop.f32.mrb[0].mxu0
      %1185 = vmatprep.mubr.bf16.mxu0 0
      %1186 = vmatmul.mubr.bf16.gmra.mrb[0].mxu0 %v1031
      %v1187 = vpop.f32.mrb[0].mxu0
      %v1188 = vadd.f32 %v1063, %v1187
      %v1189 = vpop.f32.mrb[0].mxu0
      %v1190 = vpop.f32.mrb[0].mxu0
      %v1191 = vadd.f32 %v1063, %v1190
      %v1192 = vpop.f32.mrb[0].mxu0
      %1193 = vmatprep.mubr.bf16.mxu0 0
      %1194 = vmatmul.mubr.bf16.gmra.mrb[0].mxu0 %v1032
      %v1195 = vpop.f32.mrb[0].mxu0
      %v1196 = vadd.f32 %v1063, %v1195
      %v1197 = vpop.f32.mrb[0].mxu0
      %v1198 = vpop.f32.mrb[0].mxu0
      %v1199 = vadd.f32 %v1063, %v1198
      %v1200 = vpop.f32.mrb[0].mxu0
      %1201 = vmatprep.mubr.bf16.mxu0 0
      %1202 = vmatmul.mubr.bf16.gmra.mrb[0].mxu0 %v1033
      %v1203 = vpop.f32.mrb[0].mxu0
      %v1204 = vadd.f32 %v1063, %v1203
      %v1205 = vpop.f32.mrb[0].mxu0
      %v1206 = vpop.f32.mrb[0].mxu0
      %v1207 = vadd.f32 %v1063, %v1206
      %v1208 = vpop.f32.mrb[0].mxu0
      %1209 = vmatprep.mubr.bf16.mxu0 0
      %1210 = vmatmul.mubr.bf16.gmra.mrb[0].mxu0 %v1034
      %v1211 = vpop.f32.mrb[0].mxu0
      %v1212 = vadd.f32 %v1063, %v1211
      %v1213 = vpop.f32.mrb[0].mxu0
      %v1214 = vpop.f32.mrb[0].mxu0
      %v1215 = vadd.f32 %v1063, %v1214
      %v1216 = vpop.f32.mrb[0].mxu0
      %1217 = vmatprep.mubr.bf16.mxu0 0
      %1218 = vmatmul.mubr.bf16.gmra.mrb[0].mxu0 %v1035
      %v1219 = vpop.f32.mrb[0].mxu0
      %v1220 = vadd.f32 %v1063, %v1219
      %v1221 = vpop.f32.mrb[0].mxu0
      %v1222 = vpop.f32.mrb[0].mxu0
      %v1223 = vadd.f32 %v1063, %v1222
      %v1224 = vpop.f32.mrb[0].mxu0
      %1225 = vmatprep.mubr.bf16.mxu0 0
      %1226 = vmatmul.mubr.bf16.gmra.mrb[0].mxu0 %v1036
      %v1227 = vpop.f32.mrb[0].mxu0
      %v1228 = vadd.f32 %v1063, %v1227
      %v1229 = vpop.f32.mrb[0].mxu0
      %v1230 = vpop.f32.mrb[0].mxu0
      %v1231 = vadd.f32 %v1063, %v1230
      %v1232 = vpop.f32.mrb[0].mxu0
      %1233 = vmatprep.mubr.bf16.mxu0 0
      %1234 = vmatmul.mubr.bf16.gmra.mrb[0].mxu0 %v1037
      %v1235 = vpop.f32.mrb[0].mxu0
      %v1236 = vadd.f32 %v1063, %v1235
      %v1237 = vpop.f32.mrb[0].mxu0
      %v1238 = vpop.f32.mrb[0].mxu0
      %v1239 = vadd.f32 %v1063, %v1238
      %v1240 = vpop.f32.mrb[0].mxu0
      %1241 = vmatprep.mubr.bf16.mxu0 0
      %1242 = vmatmul.mubr.bf16.gmra.mrb[0].mxu0 %v1038
      %v1243 = vpop.f32.mrb[0].mxu0
      %v1244 = vadd.f32 %v1063, %v1243
      %v1245 = vpop.f32.mrb[0].mxu0
      %v1246 = vpop.f32.mrb[0].mxu0
      %v1247 = vadd.f32 %v1063, %v1246
      %v1248 = vpop.f32.mrb[0].mxu0
      %1249 = vmatprep.mubr.bf16.mxu0 0
      %1250 = vmatmul.mubr.bf16.gmra.mrb[0].mxu0 %v1039
      %v1251 = vpop.f32.mrb[0].mxu0
      %v1252 = vadd.f32 %v1063, %v1251
      %v1253 = vpop.f32.mrb[0].mxu0
      %v1254 = vpop.f32.mrb[0].mxu0
      %v1255 = vadd.f32 %v1063, %v1254
      %v1256 = vpop.f32.mrb[0].mxu0
      %1257 = vmatprep.mubr.bf16.mxu0 0
      %1258 = vmatmul.mubr.bf16.gmra.mrb[0].mxu0 %v1040
      %v1259 = vpop.f32.mrb[0].mxu0
      %v1260 = vadd.f32 %v1063, %v1259
      %v1261 = vpop.f32.mrb[0].mxu0
      %v1262 = vpop.f32.mrb[0].mxu0
      %v1263 = vadd.f32 %v1063, %v1262
      %v1264 = vpop.f32.mrb[0].mxu0
      %1265 = vmatprep.mubr.bf16.mxu0 0
      %1266 = vmatmul.mubr.bf16.gmra.mrb[0].mxu0 %v1041
      %v1267 = vpop.f32.mrb[0].mxu0
      %v1268 = vadd.f32 %v1063, %v1267
      %v1269 = vpop.f32.mrb[0].mxu0
      %v1270 = vpop.f32.mrb[0].mxu0
      %v1271 = vadd.f32 %v1063, %v1270
      %v1272 = vpop.f32.mrb[0].mxu0
      %1273 = vdwg.mxu0
      %v1274 = vmax.f32 %v1148, 0.0
      %v1275 = vmax.f32 %v1151, 0.0
      %v1276 = vmax.f32 %v1156, 0.0
      %v1277 = vmax.f32 %v1159, 0.0
      %v1278 = vmax.f32 %v1164, 0.0
      %v1279 = vmax.f32 %v1167, 0.0
      %v1280 = vmax.f32 %v1172, 0.0
      %v1281 = vmax.f32 %v1175, 0.0
      %v1282 = vmax.f32 %v1180, 0.0
      %v1283 = vmax.f32 %v1183, 0.0
      %v1284 = vmax.f32 %v1188, 0.0
      %v1285 = vmax.f32 %v1191, 0.0
      %v1286 = vmax.f32 %v1196, 0.0
      %v1287 = vmax.f32 %v1199, 0.0
      %v1288 = vmax.f32 %v1204, 0.0
      %v1289 = vmax.f32 %v1207, 0.0
      %v1290 = vmax.f32 %v1212, 0.0
      %v1291 = vmax.f32 %v1215, 0.0
      %v1292 = vmax.f32 %v1220, 0.0
      %v1293 = vmax.f32 %v1223, 0.0
      %v1294 = vmax.f32 %v1228, 0.0
      %v1295 = vmax.f32 %v1231, 0.0
      %v1296 = vmax.f32 %v1236, 0.0
      %v1297 = vmax.f32 %v1239, 0.0
      %v1298 = vmax.f32 %v1244, 0.0
      %v1299 = vmax.f32 %v1247, 0.0
      %v1300 = vmax.f32 %v1252, 0.0
      %v1301 = vmax.f32 %v1255, 0.0
      %v1302 = vmax.f32 %v1260, 0.0
      %v1303 = vmax.f32 %v1263, 0.0
      %v1304 = vmax.f32 %v1268, 0.0
      %v1305 = vmax.f32 %v1271, 0.0
      %1306 = vst [vmem:[%s224] sm:$0xff] %v1274
      %1307 = vst [vmem:[%s224 + $0x8] sm:$0xff] %v1275
      %1308 = vst [vmem:[%s224 + $0x10] sm:$0xff] %v1276
      %1309 = vst [vmem:[%s224 + $0x18] sm:$0xff] %v1277
      %1310 = vst [vmem:[%s224 + $0x20] sm:$0xff] %v1278
      %1311 = vst [vmem:[%s224 + $0x28] sm:$0xff] %v1279
      %1312 = vst [vmem:[%s224 + $0x30] sm:$0xff] %v1280
      %1313 = vst [vmem:[%s224 + $0x38] sm:$0xff] %v1281
      %1314 = vst [vmem:[%s224 + $0x40] sm:$0xff] %v1282
      %1315 = vst [vmem:[%s224 + $0x48] sm:$0xff] %v1283
      %1316 = vst [vmem:[%s224 + $0x50] sm:$0xff] %v1284
      %1317 = vst [vmem:[%s224 + $0x58] sm:$0xff] %v1285
      %1318 = vst [vmem:[%s224 + $0x60] sm:$0xff] %v1286
      %1319 = vst [vmem:[%s224 + $0x68] sm:$0xff] %v1287
      %1320 = vst [vmem:[%s224 + $0x70] sm:$0xff] %v1288
      %1321 = vst [vmem:[%s224 + $0x78] sm:$0xff] %v1289
      %1322 = vst [vmem:[%s224 + $0x80] sm:$0xff] %v1290
      %1323 = vst [vmem:[%s224 + $0x88] sm:$0xff] %v1291
      %1324 = vst [vmem:[%s224 + $0x90] sm:$0xff] %v1292
      %1325 = vst [vmem:[%s224 + $0x98] sm:$0xff] %v1293
      %1326 = vst [vmem:[%s224 + $0xa0] sm:$0xff] %v1294
      %1327 = vst [vmem:[%s224 + $0xa8] sm:$0xff] %v1295
      %1328 = vst [vmem:[%s224 + $0xb0] sm:$0xff] %v1296
      %1329 = vst [vmem:[%s224 + $0xb8] sm:$0xff] %v1297
      %1330 = vst [vmem:[%s224 + $0xc0] sm:$0xff] %v1298
      %1331 = vst [vmem:[%s224 + $0xc8] sm:$0xff] %v1299
      %1332 = vst [vmem:[%s224 + $0xd0] sm:$0xff] %v1300
      %1333 = vst [vmem:[%s224 + $0xd8] sm:$0xff] %v1301
      %1334 = vst [vmem:[%s224 + $0xe0] sm:$0xff] %v1302
      %1335 = vst [vmem:[%s224 + $0xe8] sm:$0xff] %v1303
      %1336 = vst [vmem:[%s224 + $0xf0] sm:$0xff] %v1304
      %1337 = vst [vmem:[%s224 + $0xf8] sm:$0xff] %v1305
      %p1338 = scmp.lt.s32.totalorder %s16, 1
      %s1339 = scalar_select %p1338, %s16, 1
      %s1340 = smul.addr %s1339, 32
      %s1341 = smul.addr %s1340, 8
      %s1342 = scalar_lea.vmem %s5, %s1341
      // Predicated region
      $region41: #{depth_separable_conv2d.1} parent=39 // pred_check
        %p1343 = pneg %p144
      $region42: #{depth_separable_conv2d.1} parent=39 // pred_check_branch
        %1345 = sbr.rel (%p1343) target = $region44
      $region43: #{depth_separable_conv2d.1} parent=39 // pred_region
        _
      $region44: #{depth_separable_conv2d.1} parent=39 // pred_fallthru
        _
    $region40: #{depth_separable_conv2d.1} parent=5 // pred_fallthru
      _
    %p1346 = scmp.le.s32.totalorder 2, %s11
    // Predicated region
    $region45: #{depth_separable_conv2d.1} parent=5 // pred_check
      %p1347 = pneg %p1346
    $region46: #{depth_separable_conv2d.1} parent=5 // pred_check_branch
      %1349 = sbr.rel (%p1347) target = $region48
    $region47: #{depth_separable_conv2d.1} parent=5 // pred_region
      %s1350 = ssub.s32 %s11, 2
      // Predicated region
      $region49: #{depth_separable_conv2d.1} parent=47 // pred_check
        %p1351 = pneg %p150
      $region50: #{depth_separable_conv2d.1} parent=47 // pred_check_branch
        %1353 = sbr.rel (%p1351) target = $region52
      $region51: #{depth_separable_conv2d.1} parent=47 // pred_region
        %p1354 = scmp.lt.s32.totalorder %s17, 1
        %s1355 = scalar_select %p1354, %s17, 1
        %s1356 = smul.addr %s1355, 32
        %s1357 = smul.addr %s1356, 8
        %s1358 = scalar_lea.vmem %s5, %s1357
      $region52: #{depth_separable_conv2d.1} parent=47 // pred_fallthru
        _
    $region48: #{depth_separable_conv2d.1} parent=5 // pred_fallthru
      _
  $region6: #{depth_separable_conv2d.1} parent=0 // loop_footer
    %s15 = sadd.s32 1, %s11
  $region7: #{depth_separable_conv2d.1} parent=0 // loop_footer_branch
    %10 = sbr.rel target = $region3
  $region8: #{depth_separable_conv2d.1} parent=0 // loop_exit
    _

</llo_original>
